<compile_context>
chip_gen: v7x
topology: tpu7x:2x2x1
jax: 0.10.0
libtpu: 0.0.40
codegen_flags: <defaults>
</compile_context>

<pallas_src>
import functools
import math

import jax
import jax.numpy as jnp
from jax.experimental import pallas as pl
from jax.experimental.pallas import tpu as pltpu

_UNROLL_T_MAX = 32  # Python-unroll the time loops up to this T, fori_loop beyond.


# ----------------------------- Fused cell -------------------------------------

def _bilstm_cell(g, c, gw):
    """One fused (fwd+bwd) LSTM cell update.

    g:  [bt, 4*gw] pre-activations, gate blocks (i, f, o, g); each block of
        width gw = 2*H holds [forward H | backward H] lanes.
    c:  [bt, gw] packed cell state [c_fwd | c_bwd].
    """
    if gw % 128 == 0:
        # lane-aligned slice boundaries -> 2 EUP pushes (3*gw sigmoid + gw tanh)
        s = jax.nn.sigmoid(g[:, :3 * gw])
        i_g, f_g, o_g = s[:, :gw], s[:, gw:2 * gw], s[:, 2 * gw:]
        g_g = jnp.tanh(g[:, 3 * gw:])
    else:
        # small / unaligned H: activate the full vreg width and slice afterwards
        s = jax.nn.sigmoid(g)
        t = jnp.tanh(g)
        i_g, f_g, o_g = s[:, :gw], s[:, gw:2 * gw], s[:, 2 * gw:3 * gw]
        g_g = t[:, 3 * gw:]
    c_new = f_g * c + i_g * g_g
    h_new = o_g * jnp.tanh(c_new)
    return h_new, c_new


# ----------------------------- Fused Pallas kernel ----------------------------

def _lstm_ae_kernel(x_ref,
                    w_enc_in_ref, b_enc_ref, w_enc_hh_ref,
                    w_dec_in_ref, b_dec_ref, w_dec_hh_ref,
                    w_fc_f_ref, w_fc_b_ref, b_fc_ref,
                    enc_ref, dec_ref,
                    gx_scr, dec_scr,
                    *, He, Hd, T):
    f32, bf16 = jnp.float32, jnp.bfloat16
    _, bt, F2 = x_ref.shape                       # [T, bt, 2F] time-major, bf16

    # --------------------------- Encoder --------------------------------------
    # ONE matmul projects BOTH directions for ALL timesteps: lane-packed
    # [x_t | x_{T-1-t}] rows hit a [2F, 8He] weight whose top rows feed the
    # forward gate lanes and bottom rows feed the backward gate lanes.
    x2d = x_ref[...].reshape(T * bt, F2)
    gx = jnp.dot(x2d, w_enc_in_ref[...], preferred_element_type=f32) + b_enc_ref[...]
    gx_scr[...] = gx.reshape(T, bt, 8 * He)

    whh_e = w_enc_hh_ref[...]                     # [2He, 8He] block-diagonal, bf16

    h = jnp.zeros((bt, 2 * He), f32)
    c = jnp.zeros((bt, 2 * He), f32)
    hsum = jnp.zeros((bt, 2 * He), f32)

    # TODO(synk): for He >= 128 hold whh_e resident in the MXU via
    # pltpu.matmul_push_rhs / matmul_acc_lhs instead of re-streaming it per step.
    def enc_step(k, carry):
        h, c, hsum = carry
        g = gx_scr[k] + jnp.dot(h.astype(bf16), whh_e, preferred_element_type=f32)
        h, c = _bilstm_cell(g, c, 2 * He)
        return h, c, hsum + h

    if T <= _UNROLL_T_MAX:
        carry = (h, c, hsum)
        for k in range(T):
            carry = enc_step(k, carry)
        h, c, hsum = carry
    else:
        h, c, hsum = jax.lax.fori_loop(0, T, enc_step, (h, c, hsum), unroll=2)

    encoded = hsum * (1.0 / T)                    # mean over time, [h_fwd | h_bwd]
    enc_ref[...] = encoded

    # --------------------------- Decoder --------------------------------------
    # Decoder input is the repeated latent -> time-invariant: both directions'
    # input projections are computed ONCE (no repeat, no per-step input matmul).
    gx_d = (jnp.dot(encoded.astype(bf16), w_dec_in_ref[...],
                    preferred_element_type=f32) + b_dec_ref[...])     # [bt, 8Hd]

    whh_d = w_dec_hh_ref[...]                     # [2Hd, 8Hd] block-diagonal, bf16

    hd = jnp.zeros((bt, 2 * Hd), f32)
    cd = jnp.zeros((bt, 2 * Hd), f32)

    def dec_step(k, carry):
        hd, cd = carry
        g = gx_d + jnp.dot(hd.astype(bf16), whh_d, preferred_element_type=f32)
        hd, cd = _bilstm_cell(g, cd, 2 * Hd)
        # time-major scratch -> every write is a full contiguous (bt, Hd) tile
        dec_scr[0, k] = hd[:, :Hd].astype(dec_scr.dtype)
        dec_scr[1, T - 1 - k] = hd[:, Hd:].astype(dec_scr.dtype)
        return hd, cd

    if T <= _UNROLL_T_MAX:
        carry = (hd, cd)
        for k in range(T):
            carry = dec_step(k, carry)
    else:
        jax.lax.fori_loop(0, T, dec_step, (hd, cd), unroll=2)

    # Final Linear over the whole decoder sequence: two lane-dense bf16 matmuls
    # (the [2Hd, F_out] weight is pre-split per direction in the wrapper).
    hf_all = dec_scr[0].reshape(T * bt, Hd)
    hb_all = dec_scr[1].reshape(T * bt, Hd)
    out = (jnp.dot(hf_all, w_fc_f_ref[...], preferred_element_type=f32)
           + jnp.dot(hb_all, w_fc_b_ref[...], preferred_element_type=f32)
           + b_fc_ref[...])
    dec_ref[...] = out.reshape(T, bt, -1)         # time-major; transposed in XLA


# ----------------------------- Weight packing ---------------------------------

def _interleave_gate_cols(w_f, w_b):
    """[in, 4H] x2 (gate order i,f,o,g) -> [in, 8H]; per-gate block [fwd H | bwd H]."""
    n_in, four_h = w_f.shape
    H = four_h // 4
    return jnp.concatenate([w_f.reshape(n_in, 4, H),
                            w_b.reshape(n_in, 4, H)], axis=-1).reshape(n_in, 8 * H)


def _dir_stacked_input_weight(w_f, w_b):
    """Input weight for the [x_t | x_{T-1-t}] lane-packed input: [2*in, 8H]."""
    z = jnp.zeros_like(w_f)
    return jnp.concatenate([_interleave_gate_cols(w_f, z),
                            _interleave_gate_cols(jnp.zeros_like(w_b), w_b)], axis=0)


def _blockdiag_hidden_weight(whh_f, whh_b):
    """Recurrent weight for the packed state [h_fwd | h_bwd]: [2H, 8H] block-diag."""
    z = jnp.zeros_like(whh_f)
    return jnp.concatenate([_interleave_gate_cols(whh_f, z),
                            _interleave_gate_cols(z, whh_b)], axis=0)


# ----------------------------- Tiling heuristics -------------------------------

def _vmem_budget_bytes():
    """Usable VMEM budget derived from the chip (64 MiB on v7x, 128 MiB v5e/v6e)."""
    try:
        cap = getattr(pltpu.get_tpu_info(), "vmem_capacity_bytes", 64 * 1024 * 1024)
    except Exception:  # pragma: no cover - conservative fallback
        cap = 64 * 1024 * 1024
    if cap <= 64 * 1024 * 1024:
        return 48 * 1024 * 1024        # v7x-class: leave headroom below 64 MiB
    return 100 * 1024 * 1024           # v5e / v6e: 128 MiB physical


def _pick_batch_tile(B, T, F_in, He, Hd, F_out, budget):
    """Largest batch tile (divisor of B, multiple of 16 for bf16 sublane packing)
    whose VMEM residents fit the budget; keeps >= 2 grid steps when possible so
    v7x's second TensorCore gets work and the input pipeline can overlap."""
    if B <= 8:
        return B
    cands = [c for c in range(16, min(B, 512) + 1, 16) if B % c == 0]
    if not cands:
        return B

    w_elems = (2 * F_in * 8 * He + 2 * He * 8 * He + 2 * He * 8 * Hd
               + 2 * Hd * 8 * Hd + 2 * Hd * F_out)
    w_bytes = 2 * 2 * w_elems + 4 * (8 * He + 8 * Hd + F_out)   # bf16 x2 buffers

    def tile_bytes(bt):
        return (2 * (T * bt * 2 * F_in * 2)       # x block, bf16, double-buffered
                + T * bt * 8 * He * 4             # gx scratch, f32
                + 2 * T * bt * Hd * 2             # decoder hidden scratch, bf16
                + 2 * (T * bt * F_out * 4)        # decoded block, f32, double-buffered
                + 2 * (bt * 2 * He * 4))          # encoded block, f32, double-buffered

    fits = [c for c in cands if w_bytes + tile_bytes(c) <= budget]
    if not fits:
        return cands[0]
    if B >= 16:
        half = [c for c in fits if c <= B // 2]
        if half:
            return max(half)
    return max(fits)


# ----------------------------- Wrapper -----------------------------------------

def lstm_ae_forward(params, x, *, embedding_dim, batch_tile=None):
    """x: [B, T, F] f32 -> (encoded [B, 2E] f32, decoded [B, T, F_out] f32)."""
    B, T, F_in = x.shape
    He = int(embedding_dim)
    Hd = 2 * He
    F_out = params["fc"]["w_t"].shape[1]

    # ---- pack weights into the fused, direction-interleaved bf16 layout -------
    e, d, fc = params["enc"], params["dec"], params["fc"]
    w_enc_in = _dir_stacked_input_weight(e["wih_f"], e["wih_b"]).astype(jnp.bfloat16)
    w_enc_hh = _blockdiag_hidden_weight(e["whh_f"], e["whh_b"]).astype(jnp.bfloat16)
    b_enc = _interleave_gate_cols(e["b_f"], e["b_b"])
    w_dec_in = _interleave_gate_cols(d["wih_f"], d["wih_b"]).astype(jnp.bfloat16)
    w_dec_hh = _blockdiag_hidden_weight(d["whh_f"], d["whh_b"]).astype(jnp.bfloat16)
    b_dec = _interleave_gate_cols(d["b_f"], d["b_b"])
    w_fc_f = fc["w_t"][:Hd, :].astype(jnp.bfloat16)
    w_fc_b = fc["w_t"][Hd:, :].astype(jnp.bfloat16)
    b_fc = fc["b"]

    # ---- time-major input with [x_t | x_{T-1-t}] lane packing ------------------
    x_both = jnp.concatenate([x, jnp.flip(x, axis=1)], axis=-1)      # [B, T, 2F]
    x_tm = jnp.transpose(x_both, (1, 0, 2)).astype(jnp.bfloat16)     # [T, B, 2F]

    # ---- VMEM-budget-driven batch tiling ---------------------------------------
    budget = _vmem_budget_bytes()
    if batch_tile is None:
        batch_tile = _pick_batch_tile(B, T, F_in, He, Hd, F_out, budget)
    bt = batch_tile
    assert B % bt == 0 and (bt == B or bt % 16 == 0), \
        "batch tile must divide B and be a multiple of 16 (bf16 sublanes) or equal B"

    weights = [w_enc_in, b_enc, w_enc_hh,
               w_dec_in, b_dec, w_dec_hh,
               w_fc_f, w_fc_b, b_fc]

    # TODO(synk): mark the grid-invariant weights pipeline_mode=pl.Buffered(1)
    # (single-buffered) once verified on the deployed jax version; halves their
    # VMEM footprint, which matters under v7x's 64 MiB budget.
    def full_spec(a):
        nd = a.ndim
        return pl.BlockSpec(a.shape, lambda b, _nd=nd: (0,) * _nd)

    kernel = functools.partial(_lstm_ae_kernel, He=He, Hd=Hd, T=T)

    encoded, decoded_tm = pl.pallas_call(
        kernel,
        out_shape=(jax.ShapeDtypeStruct((B, 2 * He), jnp.float32),
                   jax.ShapeDtypeStruct((T, B, F_out), jnp.float32)),
        grid_spec=pltpu.PrefetchScalarGridSpec(
            num_scalar_prefetch=0,
            grid=(B // bt,),
            in_specs=[pl.BlockSpec((T, bt, 2 * F_in), lambda b: (0, b, 0))]
                     + [full_spec(w) for w in weights],
            out_specs=[pl.BlockSpec((bt, 2 * He), lambda b: (b, 0)),
                       pl.BlockSpec((T, bt, F_out), lambda b: (0, b, 0))],
            scratch_shapes=[pltpu.VMEM((T, bt, 8 * He), jnp.float32),   # gx (both dirs)
                            pltpu.VMEM((2, T, bt, Hd), jnp.bfloat16)],  # decoder hiddens
        ),
        compiler_params=pltpu.CompilerParams(
            dimension_semantics=("parallel",),      # batch tiles are independent
            vmem_limit_bytes=budget),
    )(x_tm, *weights)

    decoded = jnp.transpose(decoded_tm, (1, 0, 2))  # back to batch-major [B, T, F_out]
    return encoded, decoded


# ----------------------------- Parameter setup ---------------------------------

def init_bilstm_params(key, input_size, hidden_size):
    """PyTorch-style U(-1/sqrt(H), 1/sqrt(H)) init, gate layout (i, f, o, g),
    weights pre-transposed to [in, 4H] / [H, 4H], b_ih + b_hh pre-summed."""
    bound = 1.0 / math.sqrt(hidden_size)
    keys = jax.random.split(key, 8)

    def u(k, shape):
        return jax.random.uniform(k, shape, jnp.float32, -bound, bound)

    return {
        "wih_f": u(keys[0], (input_size, 4 * hidden_size)),
        "whh_f": u(keys[1], (hidden_size, 4 * hidden_size)),
        "b_f": u(keys[2], (1, 4 * hidden_size)) + u(keys[3], (1, 4 * hidden_size)),
        "wih_b": u(keys[4], (input_size, 4 * hidden_size)),
        "whh_b": u(keys[5], (hidden_size, 4 * hidden_size)),
        "b_b": u(keys[6], (1, 4 * hidden_size)) + u(keys[7], (1, 4 * hidden_size)),
    }


def init_linear_params(key, in_features, out_features):
    bound = 1.0 / math.sqrt(in_features)
    k1, k2 = jax.random.split(key)
    w_t = jax.random.uniform(k1, (in_features, out_features), jnp.float32, -bound, bound)
    b = jax.random.uniform(k2, (1, out_features), jnp.float32, -bound, bound)
    return {"w_t": w_t, "b": b}


def init_lstm_ae_params(key, seq_len, no_features, embedding_dim):
    k_enc, k_dec, k_fc = jax.random.split(key, 3)
    return {
        "enc": init_bilstm_params(k_enc, no_features, embedding_dim),
        "dec": init_bilstm_params(k_dec, 2 * embedding_dim, 2 * embedding_dim),
        "fc": init_linear_params(k_fc, 4 * embedding_dim, no_features),
    }


# ----------------------------- Pure-JAX reference ------------------------------

def _ref_bilstm_dir(x_seq, wih, whh, b, H, reverse):
    """Single-direction LSTM (f32), same (i, f, o, g) param layout as above."""
    def step(carry, x_t):
        h, c = carry
        g = x_t @ wih + h @ whh + b
        i_g = jax.nn.sigmoid(g[:, :H])
        f_g = jax.nn.sigmoid(g[:, H:2 * H])
        o_g = jax.nn.sigmoid(g[:, 2 * H:3 * H])
        g_g = jnp.tanh(g[:, 3 * H:])
        c = f_g * c + i_g * g_g
        h = o_g * jnp.tanh(c)
        return (h, c), h

    Bsz = x_seq.shape[0]
    xs = jnp.transpose(x_seq, (1, 0, 2))
    if reverse:
        xs = xs[::-1]
    (_, _), hs = jax.lax.scan(step, (jnp.zeros((Bsz, H)), jnp.zeros((Bsz, H))), xs)
    if reverse:
        hs = hs[::-1]
    return jnp.transpose(hs, (1, 0, 2))            # [B, T, H], time-ordered


def lstm_ae_reference(params, x, *, embedding_dim):
    He = int(embedding_dim)
    Hd = 2 * He
    e, d, fc = params["enc"], params["dec"], params["fc"]
    B, T, _ = x.shape

    hf = _ref_bilstm_dir(x, e["wih_f"], e["whh_f"], e["b_f"], He, False)
    hb = _ref_bilstm_dir(x, e["wih_b"], e["whh_b"], e["b_b"], He, True)
    encoded = jnp.mean(jnp.concatenate([hf, hb], axis=-1), axis=1)   # [B, 2He]

    xd = jnp.broadcast_to(encoded[:, None, :], (B, T, 2 * He))
    df = _ref_bilstm_dir(xd, d["wih_f"], d["whh_f"], d["b_f"], Hd, False)
    db = _ref_bilstm_dir(xd, d["wih_b"], d["whh_b"], d["b_b"], Hd, True)
    decoded = jnp.concatenate([df, db], axis=-1) @ fc["w_t"] + fc["b"]
    return encoded, decoded


# ----------------------------- Main ---------------------------------------------

if __name__ == "__main__":
    B, T, F, E = 2, 8, 4, 8  # batch, seq_len, no_features, embedding_dim

    key = jax.random.PRNGKey(0)
    k_params, k_x = jax.random.split(key)
    params = init_lstm_ae_params(k_params, T, F, E)
    x = jax.random.normal(k_x, (B, T, F), jnp.float32)

    fwd = jax.jit(functools.partial(lstm_ae_forward, embedding_dim=E))
    encoded, decoded = fwd(params, x)
    jax.block_until_ready((encoded, decoded))

    assert encoded.shape == (B, 2 * E)
    assert decoded.shape == (B, T, F)

    # parity check against a pure-JAX f32 reference (kernel uses bf16 matmul
    # operands -> loose tolerance)
    enc_want, dec_want = jax.jit(
        functools.partial(lstm_ae_reference, embedding_dim=E))(params, x)
    enc_err = float(jnp.max(jnp.abs(encoded - enc_want)))
    dec_err = float(jnp.max(jnp.abs(decoded - dec_want)))
    assert enc_err < 5e-2 and dec_err < 5e-2, (enc_err, dec_err)

    print("KERNEL_OK")
</pallas_src>

<mosaic_0001>
module attributes {stable_mosaic.version = 11 : i64} {
  func.func @_lstm_ae_kernel(%arg0: i32, %arg1: memref<8x2x8xbf16, #tpu.memory_space<vmem>>, %arg2: memref<8x64xbf16, #tpu.memory_space<vmem>>, %arg3: memref<1x64xf32, #tpu.memory_space<vmem>>, %arg4: memref<16x64xbf16, #tpu.memory_space<vmem>>, %arg5: memref<16x128xbf16, #tpu.memory_space<vmem>>, %arg6: memref<1x128xf32, #tpu.memory_space<vmem>>, %arg7: memref<32x128xbf16, #tpu.memory_space<vmem>>, %arg8: memref<16x4xbf16, #tpu.memory_space<vmem>>, %arg9: memref<16x4xbf16, #tpu.memory_space<vmem>>, %arg10: memref<1x4xf32, #tpu.memory_space<vmem>>, %arg11: memref<2x16xf32, #tpu.memory_space<vmem>>, %arg12: memref<8x2x4xf32, #tpu.memory_space<vmem>>, %arg13: memref<8x2x64xf32, #tpu.memory_space<vmem>>, %arg14: memref<2x8x2x16xbf16, #tpu.memory_space<vmem>>) attributes {dimension_semantics = [#tpu.dimension_semantics<parallel>], iteration_bounds = array<i64: 1>, scalar_prefetch = 0 : i64, scratch_operands = 2 : i64, tpu.core_type = #tpu.core_type<tc>, window_params = [{transform_indices = @transform_0, window_bounds = array<i64: 8, 2, 8>}, {pipeline_mode = #tpu.pipeline_mode<synchronous>, transform_indices = @transform_1, window_bounds = array<i64: 8, 64>}, {pipeline_mode = #tpu.pipeline_mode<synchronous>, transform_indices = @transform_2, window_bounds = array<i64: 1, 64>}, {pipeline_mode = #tpu.pipeline_mode<synchronous>, transform_indices = @transform_3, window_bounds = array<i64: 16, 64>}, {pipeline_mode = #tpu.pipeline_mode<synchronous>, transform_indices = @transform_4, window_bounds = array<i64: 16, 128>}, {pipeline_mode = #tpu.pipeline_mode<synchronous>, transform_indices = @transform_5, window_bounds = array<i64: 1, 128>}, {pipeline_mode = #tpu.pipeline_mode<synchronous>, transform_indices = @transform_6, window_bounds = array<i64: 32, 128>}, {pipeline_mode = #tpu.pipeline_mode<synchronous>, transform_indices = @transform_7, window_bounds = array<i64: 16, 4>}, {pipeline_mode = #tpu.pipeline_mode<synchronous>, transform_indices = @transform_8, window_bounds = array<i64: 16, 4>}, {pipeline_mode = #tpu.pipeline_mode<synchronous>, transform_indices = @transform_9, window_bounds = array<i64: 1, 4>}, {transform_indices = @transform_10, window_bounds = array<i64: 2, 16>}, {transform_indices = @transform_11, window_bounds = array<i64: 8, 2, 4>}]} {
    %c0 = arith.constant 0 : index
    %c0_0 = arith.constant 0 : index
    %c0_1 = arith.constant 0 : index
    %0 = vector.load %arg1[%c0, %c0_0, %c0_1] : memref<8x2x8xbf16, #tpu.memory_space<vmem>>, vector<8x2x8xbf16>
    %1 = vector.shape_cast %0 : vector<8x2x8xbf16> to vector<16x8xbf16>
    %c0_2 = arith.constant 0 : index
    %c0_3 = arith.constant 0 : index
    %2 = vector.load %arg2[%c0_2, %c0_3] : memref<8x64xbf16, #tpu.memory_space<vmem>>, vector<8x64xbf16>
    %cst = arith.constant dense<0.000000e+00> : vector<16x64xf32>
    %3 = tpu.matmul %1, %2, %cst {dimension_numbers = #tpu.dot_dimension_numbers<[1], [0], [0], [1], [0, 0, 1, 1], [], []>} : vector<16x8xbf16>, vector<8x64xbf16>, vector<16x64xf32> -> vector<16x64xf32>
    %c0_4 = arith.constant 0 : index
    %c0_5 = arith.constant 0 : index
    %4 = vector.load %arg3[%c0_4, %c0_5] : memref<1x64xf32, #tpu.memory_space<vmem>>, vector<1x64xf32>
    %5 = vector.broadcast %4 : vector<1x64xf32> to vector<16x64xf32>
    %6 = arith.addf %3, %5 : vector<16x64xf32>
    %7 = vector.shape_cast %6 : vector<16x64xf32> to vector<8x2x64xf32>
    %c0_6 = arith.constant 0 : index
    %c0_7 = arith.constant 0 : index
    %c0_8 = arith.constant 0 : index
    %8 = vector.load %arg13[%c0_6, %c0_7, %c0_8] : memref<8x2x64xf32, #tpu.memory_space<vmem>>, vector<8x2x64xf32>
    tpu.vector_store %arg13[%c0_6, %c0_7, %c0_8], %7 {strides = array<i32>} : memref<8x2x64xf32, #tpu.memory_space<vmem>>, vector<8x2x64xf32>,
    %c0_9 = arith.constant 0 : index
    %c0_10 = arith.constant 0 : index
    %9 = vector.load %arg4[%c0_9, %c0_10] : memref<16x64xbf16, #tpu.memory_space<vmem>>, vector<16x64xbf16>
    %cst_11 = arith.constant 0.000000e+00 : f32
    %10 = vector.broadcast %cst_11 : f32 to vector<2x16xf32>
    %cst_12 = arith.constant 0.000000e+00 : f32
    %11 = vector.broadcast %cst_12 : f32 to vector<2x16xf32>
    %cst_13 = arith.constant 0.000000e+00 : f32
    %12 = vector.broadcast %cst_13 : f32 to vector<2x16xf32>
    %c0_14 = arith.constant 0 : index
    %c0_15 = arith.constant 0 : index
    %c0_16 = arith.constant 0 : index
    %13 = vector.load %arg13[%c0_14, %c0_15, %c0_16] : memref<8x2x64xf32, #tpu.memory_space<vmem>>, vector<1x2x64xf32>
    %14 = vector.shape_cast %13 : vector<1x2x64xf32> to vector<2x64xf32>
    %15 = arith.truncf %10 : vector<2x16xf32> to vector<2x16xbf16>
    %cst_17 = arith.constant dense<0.000000e+00> : vector<2x64xf32>
    %16 = tpu.matmul %15, %9, %cst_17 {dimension_numbers = #tpu.dot_dimension_numbers<[1], [0], [0], [1], [0, 0, 1, 1], [], []>} : vector<2x16xbf16>, vector<16x64xbf16>, vector<2x64xf32> -> vector<2x64xf32>
    %17 = arith.addf %14, %16 : vector<2x64xf32>
    %18 = arith.negf %17 : vector<2x64xf32>
    %19 = math.exp %18 : vector<2x64xf32>
    %cst_18 = arith.constant 1.000000e+00 : f32
    %20 = vector.broadcast %cst_18 : f32 to vector<2x64xf32>
    %21 = arith.addf %20, %19 : vector<2x64xf32>
    %22 = arith.divf %20, %21 : vector<2x64xf32>
    %23 = math.tanh %17 : vector<2x64xf32>
    %24 = vector.extract_strided_slice %22 {offsets = [0, 0], sizes = [2, 16], strides = [1, 1]} : vector<2x64xf32> to vector<2x16xf32>
    %25 = vector.extract_strided_slice %22 {offsets = [0, 16], sizes = [2, 16], strides = [1, 1]} : vector<2x64xf32> to vector<2x16xf32>
    %26 = vector.extract_strided_slice %22 {offsets = [0, 32], sizes = [2, 16], strides = [1, 1]} : vector<2x64xf32> to vector<2x16xf32>
    %27 = vector.extract_strided_slice %23 {offsets = [0, 48], sizes = [2, 16], strides = [1, 1]} : vector<2x64xf32> to vector<2x16xf32>
    %28 = arith.mulf %25, %11 : vector<2x16xf32>
    %29 = arith.mulf %24, %27 : vector<2x16xf32>
    %30 = arith.addf %28, %29 : vector<2x16xf32>
    %31 = math.tanh %30 : vector<2x16xf32>
    %32 = arith.mulf %26, %31 : vector<2x16xf32>
    %33 = arith.addf %12, %32 : vector<2x16xf32>
    %c1 = arith.constant 1 : index
    %c0_19 = arith.constant 0 : index
    %c0_20 = arith.constant 0 : index
    %34 = vector.load %arg13[%c1, %c0_19, %c0_20] : memref<8x2x64xf32, #tpu.memory_space<vmem>>, vector<1x2x64xf32>
    %35 = vector.shape_cast %34 : vector<1x2x64xf32> to vector<2x64xf32>
    %36 = arith.truncf %32 : vector<2x16xf32> to vector<2x16xbf16>
    %cst_21 = arith.constant dense<0.000000e+00> : vector<2x64xf32>
    %37 = tpu.matmul %36, %9, %cst_21 {dimension_numbers = #tpu.dot_dimension_numbers<[1], [0], [0], [1], [0, 0, 1, 1], [], []>} : vector<2x16xbf16>, vector<16x64xbf16>, vector<2x64xf32> -> vector<2x64xf32>
    %38 = arith.addf %35, %37 : vector<2x64xf32>
    %39 = arith.negf %38 : vector<2x64xf32>
    %40 = math.exp %39 : vector<2x64xf32>
    %cst_22 = arith.constant 1.000000e+00 : f32
    %41 = vector.broadcast %cst_22 : f32 to vector<2x64xf32>
    %42 = arith.addf %41, %40 : vector<2x64xf32>
    %43 = arith.divf %41, %42 : vector<2x64xf32>
    %44 = math.tanh %38 : vector<2x64xf32>
    %45 = vector.extract_strided_slice %43 {offsets = [0, 0], sizes = [2, 16], strides = [1, 1]} : vector<2x64xf32> to vector<2x16xf32>
    %46 = vector.extract_strided_slice %43 {offsets = [0, 16], sizes = [2, 16], strides = [1, 1]} : vector<2x64xf32> to vector<2x16xf32>
    %47 = vector.extract_strided_slice %43 {offsets = [0, 32], sizes = [2, 16], strides = [1, 1]} : vector<2x64xf32> to vector<2x16xf32>
    %48 = vector.extract_strided_slice %44 {offsets = [0, 48], sizes = [2, 16], strides = [1, 1]} : vector<2x64xf32> to vector<2x16xf32>
    %49 = arith.mulf %46, %30 : vector<2x16xf32>
    %50 = arith.mulf %45, %48 : vector<2x16xf32>
    %51 = arith.addf %49, %50 : vector<2x16xf32>
    %52 = math.tanh %51 : vector<2x16xf32>
    %53 = arith.mulf %47, %52 : vector<2x16xf32>
    %54 = arith.addf %33, %53 : vector<2x16xf32>
    %c2 = arith.constant 2 : index
    %c0_23 = arith.constant 0 : index
    %c0_24 = arith.constant 0 : index
    %55 = vector.load %arg13[%c2, %c0_23, %c0_24] : memref<8x2x64xf32, #tpu.memory_space<vmem>>, vector<1x2x64xf32>
    %56 = vector.shape_cast %55 : vector<1x2x64xf32> to vector<2x64xf32>
    %57 = arith.truncf %53 : vector<2x16xf32> to vector<2x16xbf16>
    %cst_25 = arith.constant dense<0.000000e+00> : vector<2x64xf32>
    %58 = tpu.matmul %57, %9, %cst_25 {dimension_numbers = #tpu.dot_dimension_numbers<[1], [0], [0], [1], [0, 0, 1, 1], [], []>} : vector<2x16xbf16>, vector<16x64xbf16>, vector<2x64xf32> -> vector<2x64xf32>
    %59 = arith.addf %56, %58 : vector<2x64xf32>
    %60 = arith.negf %59 : vector<2x64xf32>
    %61 = math.exp %60 : vector<2x64xf32>
    %cst_26 = arith.constant 1.000000e+00 : f32
    %62 = vector.broadcast %cst_26 : f32 to vector<2x64xf32>
    %63 = arith.addf %62, %61 : vector<2x64xf32>
    %64 = arith.divf %62, %63 : vector<2x64xf32>
    %65 = math.tanh %59 : vector<2x64xf32>
    %66 = vector.extract_strided_slice %64 {offsets = [0, 0], sizes = [2, 16], strides = [1, 1]} : vector<2x64xf32> to vector<2x16xf32>
    %67 = vector.extract_strided_slice %64 {offsets = [0, 16], sizes = [2, 16], strides = [1, 1]} : vector<2x64xf32> to vector<2x16xf32>
    %68 = vector.extract_strided_slice %64 {offsets = [0, 32], sizes = [2, 16], strides = [1, 1]} : vector<2x64xf32> to vector<2x16xf32>
    %69 = vector.extract_strided_slice %65 {offsets = [0, 48], sizes = [2, 16], strides = [1, 1]} : vector<2x64xf32> to vector<2x16xf32>
    %70 = arith.mulf %67, %51 : vector<2x16xf32>
    %71 = arith.mulf %66, %69 : vector<2x16xf32>
    %72 = arith.addf %70, %71 : vector<2x16xf32>
    %73 = math.tanh %72 : vector<2x16xf32>
    %74 = arith.mulf %68, %73 : vector<2x16xf32>
    %75 = arith.addf %54, %74 : vector<2x16xf32>
    %c3 = arith.constant 3 : index
    %c0_27 = arith.constant 0 : index
    %c0_28 = arith.constant 0 : index
    %76 = vector.load %arg13[%c3, %c0_27, %c0_28] : memref<8x2x64xf32, #tpu.memory_space<vmem>>, vector<1x2x64xf32>
    %77 = vector.shape_cast %76 : vector<1x2x64xf32> to vector<2x64xf32>
    %78 = arith.truncf %74 : vector<2x16xf32> to vector<2x16xbf16>
    %cst_29 = arith.constant dense<0.000000e+00> : vector<2x64xf32>
    %79 = tpu.matmul %78, %9, %cst_29 {dimension_numbers = #tpu.dot_dimension_numbers<[1], [0], [0], [1], [0, 0, 1, 1], [], []>} : vector<2x16xbf16>, vector<16x64xbf16>, vector<2x64xf32> -> vector<2x64xf32>
    %80 = arith.addf %77, %79 : vector<2x64xf32>
    %81 = arith.negf %80 : vector<2x64xf32>
    %82 = math.exp %81 : vector<2x64xf32>
    %cst_30 = arith.constant 1.000000e+00 : f32
    %83 = vector.broadcast %cst_30 : f32 to vector<2x64xf32>
    %84 = arith.addf %83, %82 : vector<2x64xf32>
    %85 = arith.divf %83, %84 : vector<2x64xf32>
    %86 = math.tanh %80 : vector<2x64xf32>
    %87 = vector.extract_strided_slice %85 {offsets = [0, 0], sizes = [2, 16], strides = [1, 1]} : vector<2x64xf32> to vector<2x16xf32>
    %88 = vector.extract_strided_slice %85 {offsets = [0, 16], sizes = [2, 16], strides = [1, 1]} : vector<2x64xf32> to vector<2x16xf32>
    %89 = vector.extract_strided_slice %85 {offsets = [0, 32], sizes = [2, 16], strides = [1, 1]} : vector<2x64xf32> to vector<2x16xf32>
    %90 = vector.extract_strided_slice %86 {offsets = [0, 48], sizes = [2, 16], strides = [1, 1]} : vector<2x64xf32> to vector<2x16xf32>
    %91 = arith.mulf %88, %72 : vector<2x16xf32>
    %92 = arith.mulf %87, %90 : vector<2x16xf32>
    %93 = arith.addf %91, %92 : vector<2x16xf32>
    %94 = math.tanh %93 : vector<2x16xf32>
    %95 = arith.mulf %89, %94 : vector<2x16xf32>
    %96 = arith.addf %75, %95 : vector<2x16xf32>
    %c4 = arith.constant 4 : index
    %c0_31 = arith.constant 0 : index
    %c0_32 = arith.constant 0 : index
    %97 = vector.load %arg13[%c4, %c0_31, %c0_32] : memref<8x2x64xf32, #tpu.memory_space<vmem>>, vector<1x2x64xf32>
    %98 = vector.shape_cast %97 : vector<1x2x64xf32> to vector<2x64xf32>
    %99 = arith.truncf %95 : vector<2x16xf32> to vector<2x16xbf16>
    %cst_33 = arith.constant dense<0.000000e+00> : vector<2x64xf32>
    %100 = tpu.matmul %99, %9, %cst_33 {dimension_numbers = #tpu.dot_dimension_numbers<[1], [0], [0], [1], [0, 0, 1, 1], [], []>} : vector<2x16xbf16>, vector<16x64xbf16>, vector<2x64xf32> -> vector<2x64xf32>
    %101 = arith.addf %98, %100 : vector<2x64xf32>
    %102 = arith.negf %101 : vector<2x64xf32>
    %103 = math.exp %102 : vector<2x64xf32>
    %cst_34 = arith.constant 1.000000e+00 : f32
    %104 = vector.broadcast %cst_34 : f32 to vector<2x64xf32>
    %105 = arith.addf %104, %103 : vector<2x64xf32>
    %106 = arith.divf %104, %105 : vector<2x64xf32>
    %107 = math.tanh %101 : vector<2x64xf32>
    %108 = vector.extract_strided_slice %106 {offsets = [0, 0], sizes = [2, 16], strides = [1, 1]} : vector<2x64xf32> to vector<2x16xf32>
    %109 = vector.extract_strided_slice %106 {offsets = [0, 16], sizes = [2, 16], strides = [1, 1]} : vector<2x64xf32> to vector<2x16xf32>
    %110 = vector.extract_strided_slice %106 {offsets = [0, 32], sizes = [2, 16], strides = [1, 1]} : vector<2x64xf32> to vector<2x16xf32>
    %111 = vector.extract_strided_slice %107 {offsets = [0, 48], sizes = [2, 16], strides = [1, 1]} : vector<2x64xf32> to vector<2x16xf32>
    %112 = arith.mulf %109, %93 : vector<2x16xf32>
    %113 = arith.mulf %108, %111 : vector<2x16xf32>
    %114 = arith.addf %112, %113 : vector<2x16xf32>
    %115 = math.tanh %114 : vector<2x16xf32>
    %116 = arith.mulf %110, %115 : vector<2x16xf32>
    %117 = arith.addf %96, %116 : vector<2x16xf32>
    %c5 = arith.constant 5 : index
    %c0_35 = arith.constant 0 : index
    %c0_36 = arith.constant 0 : index
    %118 = vector.load %arg13[%c5, %c0_35, %c0_36] : memref<8x2x64xf32, #tpu.memory_space<vmem>>, vector<1x2x64xf32>
    %119 = vector.shape_cast %118 : vector<1x2x64xf32> to vector<2x64xf32>
    %120 = arith.truncf %116 : vector<2x16xf32> to vector<2x16xbf16>
    %cst_37 = arith.constant dense<0.000000e+00> : vector<2x64xf32>
    %121 = tpu.matmul %120, %9, %cst_37 {dimension_numbers = #tpu.dot_dimension_numbers<[1], [0], [0], [1], [0, 0, 1, 1], [], []>} : vector<2x16xbf16>, vector<16x64xbf16>, vector<2x64xf32> -> vector<2x64xf32>
    %122 = arith.addf %119, %121 : vector<2x64xf32>
    %123 = arith.negf %122 : vector<2x64xf32>
    %124 = math.exp %123 : vector<2x64xf32>
    %cst_38 = arith.constant 1.000000e+00 : f32
    %125 = vector.broadcast %cst_38 : f32 to vector<2x64xf32>
    %126 = arith.addf %125, %124 : vector<2x64xf32>
    %127 = arith.divf %125, %126 : vector<2x64xf32>
    %128 = math.tanh %122 : vector<2x64xf32>
    %129 = vector.extract_strided_slice %127 {offsets = [0, 0], sizes = [2, 16], strides = [1, 1]} : vector<2x64xf32> to vector<2x16xf32>
    %130 = vector.extract_strided_slice %127 {offsets = [0, 16], sizes = [2, 16], strides = [1, 1]} : vector<2x64xf32> to vector<2x16xf32>
    %131 = vector.extract_strided_slice %127 {offsets = [0, 32], sizes = [2, 16], strides = [1, 1]} : vector<2x64xf32> to vector<2x16xf32>
    %132 = vector.extract_strided_slice %128 {offsets = [0, 48], sizes = [2, 16], strides = [1, 1]} : vector<2x64xf32> to vector<2x16xf32>
    %133 = arith.mulf %130, %114 : vector<2x16xf32>
    %134 = arith.mulf %129, %132 : vector<2x16xf32>
    %135 = arith.addf %133, %134 : vector<2x16xf32>
    %136 = math.tanh %135 : vector<2x16xf32>
    %137 = arith.mulf %131, %136 : vector<2x16xf32>
    %138 = arith.addf %117, %137 : vector<2x16xf32>
    %c6 = arith.constant 6 : index
    %c0_39 = arith.constant 0 : index
    %c0_40 = arith.constant 0 : index
    %139 = vector.load %arg13[%c6, %c0_39, %c0_40] : memref<8x2x64xf32, #tpu.memory_space<vmem>>, vector<1x2x64xf32>
    %140 = vector.shape_cast %139 : vector<1x2x64xf32> to vector<2x64xf32>
    %141 = arith.truncf %137 : vector<2x16xf32> to vector<2x16xbf16>
    %cst_41 = arith.constant dense<0.000000e+00> : vector<2x64xf32>
    %142 = tpu.matmul %141, %9, %cst_41 {dimension_numbers = #tpu.dot_dimension_numbers<[1], [0], [0], [1], [0, 0, 1, 1], [], []>} : vector<2x16xbf16>, vector<16x64xbf16>, vector<2x64xf32> -> vector<2x64xf32>
    %143 = arith.addf %140, %142 : vector<2x64xf32>
    %144 = arith.negf %143 : vector<2x64xf32>
    %145 = math.exp %144 : vector<2x64xf32>
    %cst_42 = arith.constant 1.000000e+00 : f32
    %146 = vector.broadcast %cst_42 : f32 to vector<2x64xf32>
    %147 = arith.addf %146, %145 : vector<2x64xf32>
    %148 = arith.divf %146, %147 : vector<2x64xf32>
    %149 = math.tanh %143 : vector<2x64xf32>
    %150 = vector.extract_strided_slice %148 {offsets = [0, 0], sizes = [2, 16], strides = [1, 1]} : vector<2x64xf32> to vector<2x16xf32>
    %151 = vector.extract_strided_slice %148 {offsets = [0, 16], sizes = [2, 16], strides = [1, 1]} : vector<2x64xf32> to vector<2x16xf32>
    %152 = vector.extract_strided_slice %148 {offsets = [0, 32], sizes = [2, 16], strides = [1, 1]} : vector<2x64xf32> to vector<2x16xf32>
    %153 = vector.extract_strided_slice %149 {offsets = [0, 48], sizes = [2, 16], strides = [1, 1]} : vector<2x64xf32> to vector<2x16xf32>
    %154 = arith.mulf %151, %135 : vector<2x16xf32>
    %155 = arith.mulf %150, %153 : vector<2x16xf32>
    %156 = arith.addf %154, %155 : vector<2x16xf32>
    %157 = math.tanh %156 : vector<2x16xf32>
    %158 = arith.mulf %152, %157 : vector<2x16xf32>
    %159 = arith.addf %138, %158 : vector<2x16xf32>
    %c7 = arith.constant 7 : index
    %c0_43 = arith.constant 0 : index
    %c0_44 = arith.constant 0 : index
    %160 = vector.load %arg13[%c7, %c0_43, %c0_44] : memref<8x2x64xf32, #tpu.memory_space<vmem>>, vector<1x2x64xf32>
    %161 = vector.shape_cast %160 : vector<1x2x64xf32> to vector<2x64xf32>
    %162 = arith.truncf %158 : vector<2x16xf32> to vector<2x16xbf16>
    %cst_45 = arith.constant dense<0.000000e+00> : vector<2x64xf32>
    %163 = tpu.matmul %162, %9, %cst_45 {dimension_numbers = #tpu.dot_dimension_numbers<[1], [0], [0], [1], [0, 0, 1, 1], [], []>} : vector<2x16xbf16>, vector<16x64xbf16>, vector<2x64xf32> -> vector<2x64xf32>
    %164 = arith.addf %161, %163 : vector<2x64xf32>
    %165 = arith.negf %164 : vector<2x64xf32>
    %166 = math.exp %165 : vector<2x64xf32>
    %cst_46 = arith.constant 1.000000e+00 : f32
    %167 = vector.broadcast %cst_46 : f32 to vector<2x64xf32>
    %168 = arith.addf %167, %166 : vector<2x64xf32>
    %169 = arith.divf %167, %168 : vector<2x64xf32>
    %170 = math.tanh %164 : vector<2x64xf32>
    %171 = vector.extract_strided_slice %169 {offsets = [0, 0], sizes = [2, 16], strides = [1, 1]} : vector<2x64xf32> to vector<2x16xf32>
    %172 = vector.extract_strided_slice %169 {offsets = [0, 16], sizes = [2, 16], strides = [1, 1]} : vector<2x64xf32> to vector<2x16xf32>
    %173 = vector.extract_strided_slice %169 {offsets = [0, 32], sizes = [2, 16], strides = [1, 1]} : vector<2x64xf32> to vector<2x16xf32>
    %174 = vector.extract_strided_slice %170 {offsets = [0, 48], sizes = [2, 16], strides = [1, 1]} : vector<2x64xf32> to vector<2x16xf32>
    %175 = arith.mulf %172, %156 : vector<2x16xf32>
    %176 = arith.mulf %171, %174 : vector<2x16xf32>
    %177 = arith.addf %175, %176 : vector<2x16xf32>
    %178 = math.tanh %177 : vector<2x16xf32>
    %179 = arith.mulf %173, %178 : vector<2x16xf32>
    %180 = arith.addf %159, %179 : vector<2x16xf32>
    %cst_47 = arith.constant 1.250000e-01 : f32
    %181 = vector.broadcast %cst_47 : f32 to vector<2x16xf32>
    %182 = arith.mulf %180, %181 : vector<2x16xf32>
    %c0_48 = arith.constant 0 : index
    %c0_49 = arith.constant 0 : index
    %183 = vector.load %arg11[%c0_48, %c0_49] : memref<2x16xf32, #tpu.memory_space<vmem>>, vector<2x16xf32>
    tpu.vector_store %arg11[%c0_48, %c0_49], %182 {strides = array<i32>} : memref<2x16xf32, #tpu.memory_space<vmem>>, vector<2x16xf32>,
    %184 = arith.truncf %182 : vector<2x16xf32> to vector<2x16xbf16>
    %c0_50 = arith.constant 0 : index
    %c0_51 = arith.constant 0 : index
    %185 = vector.load %arg5[%c0_50, %c0_51] : memref<16x128xbf16, #tpu.memory_space<vmem>>, vector<16x128xbf16>
    %cst_52 = arith.constant dense<0.000000e+00> : vector<2x128xf32>
    %186 = tpu.matmul %184, %185, %cst_52 {dimension_numbers = #tpu.dot_dimension_numbers<[1], [0], [0], [1], [0, 0, 1, 1], [], []>} : vector<2x16xbf16>, vector<16x128xbf16>, vector<2x128xf32> -> vector<2x128xf32>
    %c0_53 = arith.constant 0 : index
    %c0_54 = arith.constant 0 : index
    %187 = vector.load %arg6[%c0_53, %c0_54] : memref<1x128xf32, #tpu.memory_space<vmem>>, vector<1x128xf32>
    %188 = vector.broadcast %187 : vector<1x128xf32> to vector<2x128xf32>
    %189 = arith.addf %186, %188 : vector<2x128xf32>
    %c0_55 = arith.constant 0 : index
    %c0_56 = arith.constant 0 : index
    %190 = vector.load %arg7[%c0_55, %c0_56] : memref<32x128xbf16, #tpu.memory_space<vmem>>, vector<32x128xbf16>
    %cst_57 = arith.constant 0.000000e+00 : f32
    %191 = vector.broadcast %cst_57 : f32 to vector<2x32xf32>
    %cst_58 = arith.constant 0.000000e+00 : f32
    %192 = vector.broadcast %cst_58 : f32 to vector<2x32xf32>
    %193 = arith.truncf %191 : vector<2x32xf32> to vector<2x32xbf16>
    %cst_59 = arith.constant dense<0.000000e+00> : vector<2x128xf32>
    %194 = tpu.matmul %193, %190, %cst_59 {dimension_numbers = #tpu.dot_dimension_numbers<[1], [0], [0], [1], [0, 0, 1, 1], [], []>} : vector<2x32xbf16>, vector<32x128xbf16>, vector<2x128xf32> -> vector<2x128xf32>
    %195 = arith.addf %189, %194 : vector<2x128xf32>
    %196 = arith.negf %195 : vector<2x128xf32>
    %197 = math.exp %196 : vector<2x128xf32>
    %cst_60 = arith.constant 1.000000e+00 : f32
    %198 = vector.broadcast %cst_60 : f32 to vector<2x128xf32>
    %199 = arith.addf %198, %197 : vector<2x128xf32>
    %200 = arith.divf %198, %199 : vector<2x128xf32>
    %201 = math.tanh %195 : vector<2x128xf32>
    %202 = vector.extract_strided_slice %200 {offsets = [0, 0], sizes = [2, 32], strides = [1, 1]} : vector<2x128xf32> to vector<2x32xf32>
    %203 = vector.extract_strided_slice %200 {offsets = [0, 32], sizes = [2, 32], strides = [1, 1]} : vector<2x128xf32> to vector<2x32xf32>
    %204 = vector.extract_strided_slice %200 {offsets = [0, 64], sizes = [2, 32], strides = [1, 1]} : vector<2x128xf32> to vector<2x32xf32>
    %205 = vector.extract_strided_slice %201 {offsets = [0, 96], sizes = [2, 32], strides = [1, 1]} : vector<2x128xf32> to vector<2x32xf32>
    %206 = arith.mulf %203, %192 : vector<2x32xf32>
    %207 = arith.mulf %202, %205 : vector<2x32xf32>
    %208 = arith.addf %206, %207 : vector<2x32xf32>
    %209 = math.tanh %208 : vector<2x32xf32>
    %210 = arith.mulf %204, %209 : vector<2x32xf32>
    %211 = vector.extract_strided_slice %210 {offsets = [0, 0], sizes = [2, 16], strides = [1, 1]} : vector<2x32xf32> to vector<2x16xf32>
    %212 = arith.truncf %211 : vector<2x16xf32> to vector<2x16xbf16>
    %c0_61 = arith.constant 0 : index
    %c0_62 = arith.constant 0 : index
    %c0_63 = arith.constant 0 : index
    %c0_64 = arith.constant 0 : index
    %213 = vector.load %arg14[%c0_61, %c0_62, %c0_63, %c0_64] : memref<2x8x2x16xbf16, #tpu.memory_space<vmem>>, vector<1x1x2x16xbf16>
    %214 = vector.shape_cast %213 : vector<1x1x2x16xbf16> to vector<2x16xbf16>
    %215 = vector.shape_cast %212 : vector<2x16xbf16> to vector<1x1x2x16xbf16>
    tpu.vector_store %arg14[%c0_61, %c0_62, %c0_63, %c0_64], %215 {strides = array<i32>} : memref<2x8x2x16xbf16, #tpu.memory_space<vmem>>, vector<1x1x2x16xbf16>,
    %216 = vector.extract_strided_slice %210 {offsets = [0, 16], sizes = [2, 16], strides = [1, 1]} : vector<2x32xf32> to vector<2x16xf32>
    %217 = arith.truncf %216 : vector<2x16xf32> to vector<2x16xbf16>
    %c1_65 = arith.constant 1 : index
    %c7_66 = arith.constant 7 : index
    %c0_67 = arith.constant 0 : index
    %c0_68 = arith.constant 0 : index
    %218 = vector.load %arg14[%c1_65, %c7_66, %c0_67, %c0_68] : memref<2x8x2x16xbf16, #tpu.memory_space<vmem>>, vector<1x1x2x16xbf16>
    %219 = vector.shape_cast %218 : vector<1x1x2x16xbf16> to vector<2x16xbf16>
    %220 = vector.shape_cast %217 : vector<2x16xbf16> to vector<1x1x2x16xbf16>
    tpu.vector_store %arg14[%c1_65, %c7_66, %c0_67, %c0_68], %220 {strides = array<i32>} : memref<2x8x2x16xbf16, #tpu.memory_space<vmem>>, vector<1x1x2x16xbf16>,
    %221 = arith.truncf %210 : vector<2x32xf32> to vector<2x32xbf16>
    %cst_69 = arith.constant dense<0.000000e+00> : vector<2x128xf32>
    %222 = tpu.matmul %221, %190, %cst_69 {dimension_numbers = #tpu.dot_dimension_numbers<[1], [0], [0], [1], [0, 0, 1, 1], [], []>} : vector<2x32xbf16>, vector<32x128xbf16>, vector<2x128xf32> -> vector<2x128xf32>
    %223 = arith.addf %189, %222 : vector<2x128xf32>
    %224 = arith.negf %223 : vector<2x128xf32>
    %225 = math.exp %224 : vector<2x128xf32>
    %cst_70 = arith.constant 1.000000e+00 : f32
    %226 = vector.broadcast %cst_70 : f32 to vector<2x128xf32>
    %227 = arith.addf %226, %225 : vector<2x128xf32>
    %228 = arith.divf %226, %227 : vector<2x128xf32>
    %229 = math.tanh %223 : vector<2x128xf32>
    %230 = vector.extract_strided_slice %228 {offsets = [0, 0], sizes = [2, 32], strides = [1, 1]} : vector<2x128xf32> to vector<2x32xf32>
    %231 = vector.extract_strided_slice %228 {offsets = [0, 32], sizes = [2, 32], strides = [1, 1]} : vector<2x128xf32> to vector<2x32xf32>
    %232 = vector.extract_strided_slice %228 {offsets = [0, 64], sizes = [2, 32], strides = [1, 1]} : vector<2x128xf32> to vector<2x32xf32>
    %233 = vector.extract_strided_slice %229 {offsets = [0, 96], sizes = [2, 32], strides = [1, 1]} : vector<2x128xf32> to vector<2x32xf32>
    %234 = arith.mulf %231, %208 : vector<2x32xf32>
    %235 = arith.mulf %230, %233 : vector<2x32xf32>
    %236 = arith.addf %234, %235 : vector<2x32xf32>
    %237 = math.tanh %236 : vector<2x32xf32>
    %238 = arith.mulf %232, %237 : vector<2x32xf32>
    %239 = vector.extract_strided_slice %238 {offsets = [0, 0], sizes = [2, 16], strides = [1, 1]} : vector<2x32xf32> to vector<2x16xf32>
    %240 = arith.truncf %239 : vector<2x16xf32> to vector<2x16xbf16>
    %c0_71 = arith.constant 0 : index
    %c1_72 = arith.constant 1 : index
    %c0_73 = arith.constant 0 : index
    %c0_74 = arith.constant 0 : index
    %241 = vector.load %arg14[%c0_71, %c1_72, %c0_73, %c0_74] : memref<2x8x2x16xbf16, #tpu.memory_space<vmem>>, vector<1x1x2x16xbf16>
    %242 = vector.shape_cast %241 : vector<1x1x2x16xbf16> to vector<2x16xbf16>
    %243 = vector.shape_cast %240 : vector<2x16xbf16> to vector<1x1x2x16xbf16>
    tpu.vector_store %arg14[%c0_71, %c1_72, %c0_73, %c0_74], %243 {strides = array<i32>} : memref<2x8x2x16xbf16, #tpu.memory_space<vmem>>, vector<1x1x2x16xbf16>,
    %244 = vector.extract_strided_slice %238 {offsets = [0, 16], sizes = [2, 16], strides = [1, 1]} : vector<2x32xf32> to vector<2x16xf32>
    %245 = arith.truncf %244 : vector<2x16xf32> to vector<2x16xbf16>
    %c1_75 = arith.constant 1 : index
    %c6_76 = arith.constant 6 : index
    %c0_77 = arith.constant 0 : index
    %c0_78 = arith.constant 0 : index
    %246 = vector.load %arg14[%c1_75, %c6_76, %c0_77, %c0_78] : memref<2x8x2x16xbf16, #tpu.memory_space<vmem>>, vector<1x1x2x16xbf16>
    %247 = vector.shape_cast %246 : vector<1x1x2x16xbf16> to vector<2x16xbf16>
    %248 = vector.shape_cast %245 : vector<2x16xbf16> to vector<1x1x2x16xbf16>
    tpu.vector_store %arg14[%c1_75, %c6_76, %c0_77, %c0_78], %248 {strides = array<i32>} : memref<2x8x2x16xbf16, #tpu.memory_space<vmem>>, vector<1x1x2x16xbf16>,
    %249 = arith.truncf %238 : vector<2x32xf32> to vector<2x32xbf16>
    %cst_79 = arith.constant dense<0.000000e+00> : vector<2x128xf32>
    %250 = tpu.matmul %249, %190, %cst_79 {dimension_numbers = #tpu.dot_dimension_numbers<[1], [0], [0], [1], [0, 0, 1, 1], [], []>} : vector<2x32xbf16>, vector<32x128xbf16>, vector<2x128xf32> -> vector<2x128xf32>
    %251 = arith.addf %189, %250 : vector<2x128xf32>
    %252 = arith.negf %251 : vector<2x128xf32>
    %253 = math.exp %252 : vector<2x128xf32>
    %cst_80 = arith.constant 1.000000e+00 : f32
    %254 = vector.broadcast %cst_80 : f32 to vector<2x128xf32>
    %255 = arith.addf %254, %253 : vector<2x128xf32>
    %256 = arith.divf %254, %255 : vector<2x128xf32>
    %257 = math.tanh %251 : vector<2x128xf32>
    %258 = vector.extract_strided_slice %256 {offsets = [0, 0], sizes = [2, 32], strides = [1, 1]} : vector<2x128xf32> to vector<2x32xf32>
    %259 = vector.extract_strided_slice %256 {offsets = [0, 32], sizes = [2, 32], strides = [1, 1]} : vector<2x128xf32> to vector<2x32xf32>
    %260 = vector.extract_strided_slice %256 {offsets = [0, 64], sizes = [2, 32], strides = [1, 1]} : vector<2x128xf32> to vector<2x32xf32>
    %261 = vector.extract_strided_slice %257 {offsets = [0, 96], sizes = [2, 32], strides = [1, 1]} : vector<2x128xf32> to vector<2x32xf32>
    %262 = arith.mulf %259, %236 : vector<2x32xf32>
    %263 = arith.mulf %258, %261 : vector<2x32xf32>
    %264 = arith.addf %262, %263 : vector<2x32xf32>
    %265 = math.tanh %264 : vector<2x32xf32>
    %266 = arith.mulf %260, %265 : vector<2x32xf32>
    %267 = vector.extract_strided_slice %266 {offsets = [0, 0], sizes = [2, 16], strides = [1, 1]} : vector<2x32xf32> to vector<2x16xf32>
    %268 = arith.truncf %267 : vector<2x16xf32> to vector<2x16xbf16>
    %c0_81 = arith.constant 0 : index
    %c2_82 = arith.constant 2 : index
    %c0_83 = arith.constant 0 : index
    %c0_84 = arith.constant 0 : index
    %269 = vector.load %arg14[%c0_81, %c2_82, %c0_83, %c0_84] : memref<2x8x2x16xbf16, #tpu.memory_space<vmem>>, vector<1x1x2x16xbf16>
    %270 = vector.shape_cast %269 : vector<1x1x2x16xbf16> to vector<2x16xbf16>
    %271 = vector.shape_cast %268 : vector<2x16xbf16> to vector<1x1x2x16xbf16>
    tpu.vector_store %arg14[%c0_81, %c2_82, %c0_83, %c0_84], %271 {strides = array<i32>} : memref<2x8x2x16xbf16, #tpu.memory_space<vmem>>, vector<1x1x2x16xbf16>,
    %272 = vector.extract_strided_slice %266 {offsets = [0, 16], sizes = [2, 16], strides = [1, 1]} : vector<2x32xf32> to vector<2x16xf32>
    %273 = arith.truncf %272 : vector<2x16xf32> to vector<2x16xbf16>
    %c1_85 = arith.constant 1 : index
    %c5_86 = arith.constant 5 : index
    %c0_87 = arith.constant 0 : index
    %c0_88 = arith.constant 0 : index
    %274 = vector.load %arg14[%c1_85, %c5_86, %c0_87, %c0_88] : memref<2x8x2x16xbf16, #tpu.memory_space<vmem>>, vector<1x1x2x16xbf16>
    %275 = vector.shape_cast %274 : vector<1x1x2x16xbf16> to vector<2x16xbf16>
    %276 = vector.shape_cast %273 : vector<2x16xbf16> to vector<1x1x2x16xbf16>
    tpu.vector_store %arg14[%c1_85, %c5_86, %c0_87, %c0_88], %276 {strides = array<i32>} : memref<2x8x2x16xbf16, #tpu.memory_space<vmem>>, vector<1x1x2x16xbf16>,
    %277 = arith.truncf %266 : vector<2x32xf32> to vector<2x32xbf16>
    %cst_89 = arith.constant dense<0.000000e+00> : vector<2x128xf32>
    %278 = tpu.matmul %277, %190, %cst_89 {dimension_numbers = #tpu.dot_dimension_numbers<[1], [0], [0], [1], [0, 0, 1, 1], [], []>} : vector<2x32xbf16>, vector<32x128xbf16>, vector<2x128xf32> -> vector<2x128xf32>
    %279 = arith.addf %189, %278 : vector<2x128xf32>
    %280 = arith.negf %279 : vector<2x128xf32>
    %281 = math.exp %280 : vector<2x128xf32>
    %cst_90 = arith.constant 1.000000e+00 : f32
    %282 = vector.broadcast %cst_90 : f32 to vector<2x128xf32>
    %283 = arith.addf %282, %281 : vector<2x128xf32>
    %284 = arith.divf %282, %283 : vector<2x128xf32>
    %285 = math.tanh %279 : vector<2x128xf32>
    %286 = vector.extract_strided_slice %284 {offsets = [0, 0], sizes = [2, 32], strides = [1, 1]} : vector<2x128xf32> to vector<2x32xf32>
    %287 = vector.extract_strided_slice %284 {offsets = [0, 32], sizes = [2, 32], strides = [1, 1]} : vector<2x128xf32> to vector<2x32xf32>
    %288 = vector.extract_strided_slice %284 {offsets = [0, 64], sizes = [2, 32], strides = [1, 1]} : vector<2x128xf32> to vector<2x32xf32>
    %289 = vector.extract_strided_slice %285 {offsets = [0, 96], sizes = [2, 32], strides = [1, 1]} : vector<2x128xf32> to vector<2x32xf32>
    %290 = arith.mulf %287, %264 : vector<2x32xf32>
    %291 = arith.mulf %286, %289 : vector<2x32xf32>
    %292 = arith.addf %290, %291 : vector<2x32xf32>
    %293 = math.tanh %292 : vector<2x32xf32>
    %294 = arith.mulf %288, %293 : vector<2x32xf32>
    %295 = vector.extract_strided_slice %294 {offsets = [0, 0], sizes = [2, 16], strides = [1, 1]} : vector<2x32xf32> to vector<2x16xf32>
    %296 = arith.truncf %295 : vector<2x16xf32> to vector<2x16xbf16>
    %c0_91 = arith.constant 0 : index
    %c3_92 = arith.constant 3 : index
    %c0_93 = arith.constant 0 : index
    %c0_94 = arith.constant 0 : index
    %297 = vector.load %arg14[%c0_91, %c3_92, %c0_93, %c0_94] : memref<2x8x2x16xbf16, #tpu.memory_space<vmem>>, vector<1x1x2x16xbf16>
    %298 = vector.shape_cast %297 : vector<1x1x2x16xbf16> to vector<2x16xbf16>
    %299 = vector.shape_cast %296 : vector<2x16xbf16> to vector<1x1x2x16xbf16>
    tpu.vector_store %arg14[%c0_91, %c3_92, %c0_93, %c0_94], %299 {strides = array<i32>} : memref<2x8x2x16xbf16, #tpu.memory_space<vmem>>, vector<1x1x2x16xbf16>,
    %300 = vector.extract_strided_slice %294 {offsets = [0, 16], sizes = [2, 16], strides = [1, 1]} : vector<2x32xf32> to vector<2x16xf32>
    %301 = arith.truncf %300 : vector<2x16xf32> to vector<2x16xbf16>
    %c1_95 = arith.constant 1 : index
    %c4_96 = arith.constant 4 : index
    %c0_97 = arith.constant 0 : index
    %c0_98 = arith.constant 0 : index
    %302 = vector.load %arg14[%c1_95, %c4_96, %c0_97, %c0_98] : memref<2x8x2x16xbf16, #tpu.memory_space<vmem>>, vector<1x1x2x16xbf16>
    %303 = vector.shape_cast %302 : vector<1x1x2x16xbf16> to vector<2x16xbf16>
    %304 = vector.shape_cast %301 : vector<2x16xbf16> to vector<1x1x2x16xbf16>
    tpu.vector_store %arg14[%c1_95, %c4_96, %c0_97, %c0_98], %304 {strides = array<i32>} : memref<2x8x2x16xbf16, #tpu.memory_space<vmem>>, vector<1x1x2x16xbf16>,
    %305 = arith.truncf %294 : vector<2x32xf32> to vector<2x32xbf16>
    %cst_99 = arith.constant dense<0.000000e+00> : vector<2x128xf32>
    %306 = tpu.matmul %305, %190, %cst_99 {dimension_numbers = #tpu.dot_dimension_numbers<[1], [0], [0], [1], [0, 0, 1, 1], [], []>} : vector<2x32xbf16>, vector<32x128xbf16>, vector<2x128xf32> -> vector<2x128xf32>
    %307 = arith.addf %189, %306 : vector<2x128xf32>
    %308 = arith.negf %307 : vector<2x128xf32>
    %309 = math.exp %308 : vector<2x128xf32>
    %cst_100 = arith.constant 1.000000e+00 : f32
    %310 = vector.broadcast %cst_100 : f32 to vector<2x128xf32>
    %311 = arith.addf %310, %309 : vector<2x128xf32>
    %312 = arith.divf %310, %311 : vector<2x128xf32>
    %313 = math.tanh %307 : vector<2x128xf32>
    %314 = vector.extract_strided_slice %312 {offsets = [0, 0], sizes = [2, 32], strides = [1, 1]} : vector<2x128xf32> to vector<2x32xf32>
    %315 = vector.extract_strided_slice %312 {offsets = [0, 32], sizes = [2, 32], strides = [1, 1]} : vector<2x128xf32> to vector<2x32xf32>
    %316 = vector.extract_strided_slice %312 {offsets = [0, 64], sizes = [2, 32], strides = [1, 1]} : vector<2x128xf32> to vector<2x32xf32>
    %317 = vector.extract_strided_slice %313 {offsets = [0, 96], sizes = [2, 32], strides = [1, 1]} : vector<2x128xf32> to vector<2x32xf32>
    %318 = arith.mulf %315, %292 : vector<2x32xf32>
    %319 = arith.mulf %314, %317 : vector<2x32xf32>
    %320 = arith.addf %318, %319 : vector<2x32xf32>
    %321 = math.tanh %320 : vector<2x32xf32>
    %322 = arith.mulf %316, %321 : vector<2x32xf32>
    %323 = vector.extract_strided_slice %322 {offsets = [0, 0], sizes = [2, 16], strides = [1, 1]} : vector<2x32xf32> to vector<2x16xf32>
    %324 = arith.truncf %323 : vector<2x16xf32> to vector<2x16xbf16>
    %c0_101 = arith.constant 0 : index
    %c4_102 = arith.constant 4 : index
    %c0_103 = arith.constant 0 : index
    %c0_104 = arith.constant 0 : index
    %325 = vector.load %arg14[%c0_101, %c4_102, %c0_103, %c0_104] : memref<2x8x2x16xbf16, #tpu.memory_space<vmem>>, vector<1x1x2x16xbf16>
    %326 = vector.shape_cast %325 : vector<1x1x2x16xbf16> to vector<2x16xbf16>
    %327 = vector.shape_cast %324 : vector<2x16xbf16> to vector<1x1x2x16xbf16>
    tpu.vector_store %arg14[%c0_101, %c4_102, %c0_103, %c0_104], %327 {strides = array<i32>} : memref<2x8x2x16xbf16, #tpu.memory_space<vmem>>, vector<1x1x2x16xbf16>,
    %328 = vector.extract_strided_slice %322 {offsets = [0, 16], sizes = [2, 16], strides = [1, 1]} : vector<2x32xf32> to vector<2x16xf32>
    %329 = arith.truncf %328 : vector<2x16xf32> to vector<2x16xbf16>
    %c1_105 = arith.constant 1 : index
    %c3_106 = arith.constant 3 : index
    %c0_107 = arith.constant 0 : index
    %c0_108 = arith.constant 0 : index
    %330 = vector.load %arg14[%c1_105, %c3_106, %c0_107, %c0_108] : memref<2x8x2x16xbf16, #tpu.memory_space<vmem>>, vector<1x1x2x16xbf16>
    %331 = vector.shape_cast %330 : vector<1x1x2x16xbf16> to vector<2x16xbf16>
    %332 = vector.shape_cast %329 : vector<2x16xbf16> to vector<1x1x2x16xbf16>
    tpu.vector_store %arg14[%c1_105, %c3_106, %c0_107, %c0_108], %332 {strides = array<i32>} : memref<2x8x2x16xbf16, #tpu.memory_space<vmem>>, vector<1x1x2x16xbf16>,
    %333 = arith.truncf %322 : vector<2x32xf32> to vector<2x32xbf16>
    %cst_109 = arith.constant dense<0.000000e+00> : vector<2x128xf32>
    %334 = tpu.matmul %333, %190, %cst_109 {dimension_numbers = #tpu.dot_dimension_numbers<[1], [0], [0], [1], [0, 0, 1, 1], [], []>} : vector<2x32xbf16>, vector<32x128xbf16>, vector<2x128xf32> -> vector<2x128xf32>
    %335 = arith.addf %189, %334 : vector<2x128xf32>
    %336 = arith.negf %335 : vector<2x128xf32>
    %337 = math.exp %336 : vector<2x128xf32>
    %cst_110 = arith.constant 1.000000e+00 : f32
    %338 = vector.broadcast %cst_110 : f32 to vector<2x128xf32>
    %339 = arith.addf %338, %337 : vector<2x128xf32>
    %340 = arith.divf %338, %339 : vector<2x128xf32>
    %341 = math.tanh %335 : vector<2x128xf32>
    %342 = vector.extract_strided_slice %340 {offsets = [0, 0], sizes = [2, 32], strides = [1, 1]} : vector<2x128xf32> to vector<2x32xf32>
    %343 = vector.extract_strided_slice %340 {offsets = [0, 32], sizes = [2, 32], strides = [1, 1]} : vector<2x128xf32> to vector<2x32xf32>
    %344 = vector.extract_strided_slice %340 {offsets = [0, 64], sizes = [2, 32], strides = [1, 1]} : vector<2x128xf32> to vector<2x32xf32>
    %345 = vector.extract_strided_slice %341 {offsets = [0, 96], sizes = [2, 32], strides = [1, 1]} : vector<2x128xf32> to vector<2x32xf32>
    %346 = arith.mulf %343, %320 : vector<2x32xf32>
    %347 = arith.mulf %342, %345 : vector<2x32xf32>
    %348 = arith.addf %346, %347 : vector<2x32xf32>
    %349 = math.tanh %348 : vector<2x32xf32>
    %350 = arith.mulf %344, %349 : vector<2x32xf32>
    %351 = vector.extract_strided_slice %350 {offsets = [0, 0], sizes = [2, 16], strides = [1, 1]} : vector<2x32xf32> to vector<2x16xf32>
    %352 = arith.truncf %351 : vector<2x16xf32> to vector<2x16xbf16>
    %c0_111 = arith.constant 0 : index
    %c5_112 = arith.constant 5 : index
    %c0_113 = arith.constant 0 : index
    %c0_114 = arith.constant 0 : index
    %353 = vector.load %arg14[%c0_111, %c5_112, %c0_113, %c0_114] : memref<2x8x2x16xbf16, #tpu.memory_space<vmem>>, vector<1x1x2x16xbf16>
    %354 = vector.shape_cast %353 : vector<1x1x2x16xbf16> to vector<2x16xbf16>
    %355 = vector.shape_cast %352 : vector<2x16xbf16> to vector<1x1x2x16xbf16>
    tpu.vector_store %arg14[%c0_111, %c5_112, %c0_113, %c0_114], %355 {strides = array<i32>} : memref<2x8x2x16xbf16, #tpu.memory_space<vmem>>, vector<1x1x2x16xbf16>,
    %356 = vector.extract_strided_slice %350 {offsets = [0, 16], sizes = [2, 16], strides = [1, 1]} : vector<2x32xf32> to vector<2x16xf32>
    %357 = arith.truncf %356 : vector<2x16xf32> to vector<2x16xbf16>
    %c1_115 = arith.constant 1 : index
    %c2_116 = arith.constant 2 : index
    %c0_117 = arith.constant 0 : index
    %c0_118 = arith.constant 0 : index
    %358 = vector.load %arg14[%c1_115, %c2_116, %c0_117, %c0_118] : memref<2x8x2x16xbf16, #tpu.memory_space<vmem>>, vector<1x1x2x16xbf16>
    %359 = vector.shape_cast %358 : vector<1x1x2x16xbf16> to vector<2x16xbf16>
    %360 = vector.shape_cast %357 : vector<2x16xbf16> to vector<1x1x2x16xbf16>
    tpu.vector_store %arg14[%c1_115, %c2_116, %c0_117, %c0_118], %360 {strides = array<i32>} : memref<2x8x2x16xbf16, #tpu.memory_space<vmem>>, vector<1x1x2x16xbf16>,
    %361 = arith.truncf %350 : vector<2x32xf32> to vector<2x32xbf16>
    %cst_119 = arith.constant dense<0.000000e+00> : vector<2x128xf32>
    %362 = tpu.matmul %361, %190, %cst_119 {dimension_numbers = #tpu.dot_dimension_numbers<[1], [0], [0], [1], [0, 0, 1, 1], [], []>} : vector<2x32xbf16>, vector<32x128xbf16>, vector<2x128xf32> -> vector<2x128xf32>
    %363 = arith.addf %189, %362 : vector<2x128xf32>
    %364 = arith.negf %363 : vector<2x128xf32>
    %365 = math.exp %364 : vector<2x128xf32>
    %cst_120 = arith.constant 1.000000e+00 : f32
    %366 = vector.broadcast %cst_120 : f32 to vector<2x128xf32>
    %367 = arith.addf %366, %365 : vector<2x128xf32>
    %368 = arith.divf %366, %367 : vector<2x128xf32>
    %369 = math.tanh %363 : vector<2x128xf32>
    %370 = vector.extract_strided_slice %368 {offsets = [0, 0], sizes = [2, 32], strides = [1, 1]} : vector<2x128xf32> to vector<2x32xf32>
    %371 = vector.extract_strided_slice %368 {offsets = [0, 32], sizes = [2, 32], strides = [1, 1]} : vector<2x128xf32> to vector<2x32xf32>
    %372 = vector.extract_strided_slice %368 {offsets = [0, 64], sizes = [2, 32], strides = [1, 1]} : vector<2x128xf32> to vector<2x32xf32>
    %373 = vector.extract_strided_slice %369 {offsets = [0, 96], sizes = [2, 32], strides = [1, 1]} : vector<2x128xf32> to vector<2x32xf32>
    %374 = arith.mulf %371, %348 : vector<2x32xf32>
    %375 = arith.mulf %370, %373 : vector<2x32xf32>
    %376 = arith.addf %374, %375 : vector<2x32xf32>
    %377 = math.tanh %376 : vector<2x32xf32>
    %378 = arith.mulf %372, %377 : vector<2x32xf32>
    %379 = vector.extract_strided_slice %378 {offsets = [0, 0], sizes = [2, 16], strides = [1, 1]} : vector<2x32xf32> to vector<2x16xf32>
    %380 = arith.truncf %379 : vector<2x16xf32> to vector<2x16xbf16>
    %c0_121 = arith.constant 0 : index
    %c6_122 = arith.constant 6 : index
    %c0_123 = arith.constant 0 : index
    %c0_124 = arith.constant 0 : index
    %381 = vector.load %arg14[%c0_121, %c6_122, %c0_123, %c0_124] : memref<2x8x2x16xbf16, #tpu.memory_space<vmem>>, vector<1x1x2x16xbf16>
    %382 = vector.shape_cast %381 : vector<1x1x2x16xbf16> to vector<2x16xbf16>
    %383 = vector.shape_cast %380 : vector<2x16xbf16> to vector<1x1x2x16xbf16>
    tpu.vector_store %arg14[%c0_121, %c6_122, %c0_123, %c0_124], %383 {strides = array<i32>} : memref<2x8x2x16xbf16, #tpu.memory_space<vmem>>, vector<1x1x2x16xbf16>,
    %384 = vector.extract_strided_slice %378 {offsets = [0, 16], sizes = [2, 16], strides = [1, 1]} : vector<2x32xf32> to vector<2x16xf32>
    %385 = arith.truncf %384 : vector<2x16xf32> to vector<2x16xbf16>
    %c1_125 = arith.constant 1 : index
    %c1_126 = arith.constant 1 : index
    %c0_127 = arith.constant 0 : index
    %c0_128 = arith.constant 0 : index
    %386 = vector.load %arg14[%c1_125, %c1_126, %c0_127, %c0_128] : memref<2x8x2x16xbf16, #tpu.memory_space<vmem>>, vector<1x1x2x16xbf16>
    %387 = vector.shape_cast %386 : vector<1x1x2x16xbf16> to vector<2x16xbf16>
    %388 = vector.shape_cast %385 : vector<2x16xbf16> to vector<1x1x2x16xbf16>
    tpu.vector_store %arg14[%c1_125, %c1_126, %c0_127, %c0_128], %388 {strides = array<i32>} : memref<2x8x2x16xbf16, #tpu.memory_space<vmem>>, vector<1x1x2x16xbf16>,
    %389 = arith.truncf %378 : vector<2x32xf32> to vector<2x32xbf16>
    %cst_129 = arith.constant dense<0.000000e+00> : vector<2x128xf32>
    %390 = tpu.matmul %389, %190, %cst_129 {dimension_numbers = #tpu.dot_dimension_numbers<[1], [0], [0], [1], [0, 0, 1, 1], [], []>} : vector<2x32xbf16>, vector<32x128xbf16>, vector<2x128xf32> -> vector<2x128xf32>
    %391 = arith.addf %189, %390 : vector<2x128xf32>
    %392 = arith.negf %391 : vector<2x128xf32>
    %393 = math.exp %392 : vector<2x128xf32>
    %cst_130 = arith.constant 1.000000e+00 : f32
    %394 = vector.broadcast %cst_130 : f32 to vector<2x128xf32>
    %395 = arith.addf %394, %393 : vector<2x128xf32>
    %396 = arith.divf %394, %395 : vector<2x128xf32>
    %397 = math.tanh %391 : vector<2x128xf32>
    %398 = vector.extract_strided_slice %396 {offsets = [0, 0], sizes = [2, 32], strides = [1, 1]} : vector<2x128xf32> to vector<2x32xf32>
    %399 = vector.extract_strided_slice %396 {offsets = [0, 32], sizes = [2, 32], strides = [1, 1]} : vector<2x128xf32> to vector<2x32xf32>
    %400 = vector.extract_strided_slice %396 {offsets = [0, 64], sizes = [2, 32], strides = [1, 1]} : vector<2x128xf32> to vector<2x32xf32>
    %401 = vector.extract_strided_slice %397 {offsets = [0, 96], sizes = [2, 32], strides = [1, 1]} : vector<2x128xf32> to vector<2x32xf32>
    %402 = arith.mulf %399, %376 : vector<2x32xf32>
    %403 = arith.mulf %398, %401 : vector<2x32xf32>
    %404 = arith.addf %402, %403 : vector<2x32xf32>
    %405 = math.tanh %404 : vector<2x32xf32>
    %406 = arith.mulf %400, %405 : vector<2x32xf32>
    %407 = vector.extract_strided_slice %406 {offsets = [0, 0], sizes = [2, 16], strides = [1, 1]} : vector<2x32xf32> to vector<2x16xf32>
    %408 = arith.truncf %407 : vector<2x16xf32> to vector<2x16xbf16>
    %c0_131 = arith.constant 0 : index
    %c7_132 = arith.constant 7 : index
    %c0_133 = arith.constant 0 : index
    %c0_134 = arith.constant 0 : index
    %409 = vector.load %arg14[%c0_131, %c7_132, %c0_133, %c0_134] : memref<2x8x2x16xbf16, #tpu.memory_space<vmem>>, vector<1x1x2x16xbf16>
    %410 = vector.shape_cast %409 : vector<1x1x2x16xbf16> to vector<2x16xbf16>
    %411 = vector.shape_cast %408 : vector<2x16xbf16> to vector<1x1x2x16xbf16>
    tpu.vector_store %arg14[%c0_131, %c7_132, %c0_133, %c0_134], %411 {strides = array<i32>} : memref<2x8x2x16xbf16, #tpu.memory_space<vmem>>, vector<1x1x2x16xbf16>,
    %412 = vector.extract_strided_slice %406 {offsets = [0, 16], sizes = [2, 16], strides = [1, 1]} : vector<2x32xf32> to vector<2x16xf32>
    %413 = arith.truncf %412 : vector<2x16xf32> to vector<2x16xbf16>
    %c1_135 = arith.constant 1 : index
    %c0_136 = arith.constant 0 : index
    %c0_137 = arith.constant 0 : index
    %c0_138 = arith.constant 0 : index
    %414 = vector.load %arg14[%c1_135, %c0_136, %c0_137, %c0_138] : memref<2x8x2x16xbf16, #tpu.memory_space<vmem>>, vector<1x1x2x16xbf16>
    %415 = vector.shape_cast %414 : vector<1x1x2x16xbf16> to vector<2x16xbf16>
    %416 = vector.shape_cast %413 : vector<2x16xbf16> to vector<1x1x2x16xbf16>
    tpu.vector_store %arg14[%c1_135, %c0_136, %c0_137, %c0_138], %416 {strides = array<i32>} : memref<2x8x2x16xbf16, #tpu.memory_space<vmem>>, vector<1x1x2x16xbf16>,
    %c0_139 = arith.constant 0 : index
    %c0_140 = arith.constant 0 : index
    %c0_141 = arith.constant 0 : index
    %c0_142 = arith.constant 0 : index
    %417 = vector.load %arg14[%c0_139, %c0_140, %c0_141, %c0_142] : memref<2x8x2x16xbf16, #tpu.memory_space<vmem>>, vector<1x8x2x16xbf16>
    %418 = vector.shape_cast %417 : vector<1x8x2x16xbf16> to vector<8x2x16xbf16>
    %419 = vector.shape_cast %418 : vector<8x2x16xbf16> to vector<16x16xbf16>
    %c1_143 = arith.constant 1 : index
    %c0_144 = arith.constant 0 : index
    %c0_145 = arith.constant 0 : index
    %c0_146 = arith.constant 0 : index
    %420 = vector.load %arg14[%c1_143, %c0_144, %c0_145, %c0_146] : memref<2x8x2x16xbf16, #tpu.memory_space<vmem>>, vector<1x8x2x16xbf16>
    %421 = vector.shape_cast %420 : vector<1x8x2x16xbf16> to vector<8x2x16xbf16>
    %422 = vector.shape_cast %421 : vector<8x2x16xbf16> to vector<16x16xbf16>
    %c0_147 = arith.constant 0 : index
    %c0_148 = arith.constant 0 : index
    %423 = vector.load %arg8[%c0_147, %c0_148] : memref<16x4xbf16, #tpu.memory_space<vmem>>, vector<16x4xbf16>
    %cst_149 = arith.constant dense<0.000000e+00> : vector<16x4xf32>
    %424 = tpu.matmul %419, %423, %cst_149 {dimension_numbers = #tpu.dot_dimension_numbers<[1], [0], [0], [1], [0, 0, 1, 1], [], []>} : vector<16x16xbf16>, vector<16x4xbf16>, vector<16x4xf32> -> vector<16x4xf32>
    %c0_150 = arith.constant 0 : index
    %c0_151 = arith.constant 0 : index
    %425 = vector.load %arg9[%c0_150, %c0_151] : memref<16x4xbf16, #tpu.memory_space<vmem>>, vector<16x4xbf16>
    %cst_152 = arith.constant dense<0.000000e+00> : vector<16x4xf32>
    %426 = tpu.matmul %422, %425, %cst_152 {dimension_numbers = #tpu.dot_dimension_numbers<[1], [0], [0], [1], [0, 0, 1, 1], [], []>} : vector<16x16xbf16>, vector<16x4xbf16>, vector<16x4xf32> -> vector<16x4xf32>
    %427 = arith.addf %424, %426 : vector<16x4xf32>
    %c0_153 = arith.constant 0 : index
    %c0_154 = arith.constant 0 : index
    %428 = vector.load %arg10[%c0_153, %c0_154] : memref<1x4xf32, #tpu.memory_space<vmem>>, vector<1x4xf32>
    %429 = vector.broadcast %428 : vector<1x4xf32> to vector<16x4xf32>
    %430 = arith.addf %427, %429 : vector<16x4xf32>
    %431 = vector.shape_cast %430 : vector<16x4xf32> to vector<8x2x4xf32>
    %c0_155 = arith.constant 0 : index
    %c0_156 = arith.constant 0 : index
    %c0_157 = arith.constant 0 : index
    %432 = vector.load %arg12[%c0_155, %c0_156, %c0_157] : memref<8x2x4xf32, #tpu.memory_space<vmem>>, vector<8x2x4xf32>
    tpu.vector_store %arg12[%c0_155, %c0_156, %c0_157], %431 {strides = array<i32>} : memref<8x2x4xf32, #tpu.memory_space<vmem>>, vector<8x2x4xf32>,
    return
  }
  func.func @transform_0(%arg0: i32) -> (i32, i32, i32) {
    %c0_i32 = arith.constant 0 : i32
    %c0_i32_0 = arith.constant 0 : i32
    %c0_i32_1 = arith.constant 0 : i32
    return %c0_i32, %arg0, %c0_i32_0 : i32, i32, i32
  }
  func.func @transform_1(%arg0: i32) -> (i32, i32) {
    %c0_i32 = arith.constant 0 : i32
    %c0_i32_0 = arith.constant 0 : i32
    %c0_i32_1 = arith.constant 0 : i32
    return %c0_i32, %c0_i32_0 : i32, i32
  }
  func.func @transform_2(%arg0: i32) -> (i32, i32) {
    %c0_i32 = arith.constant 0 : i32
    %c0_i32_0 = arith.constant 0 : i32
    %c0_i32_1 = arith.constant 0 : i32
    return %c0_i32, %c0_i32_0 : i32, i32
  }
  func.func @transform_3(%arg0: i32) -> (i32, i32) {
    %c0_i32 = arith.constant 0 : i32
    %c0_i32_0 = arith.constant 0 : i32
    %c0_i32_1 = arith.constant 0 : i32
    return %c0_i32, %c0_i32_0 : i32, i32
  }
  func.func @transform_4(%arg0: i32) -> (i32, i32) {
    %c0_i32 = arith.constant 0 : i32
    %c0_i32_0 = arith.constant 0 : i32
    %c0_i32_1 = arith.constant 0 : i32
    return %c0_i32, %c0_i32_0 : i32, i32
  }
  func.func @transform_5(%arg0: i32) -> (i32, i32) {
    %c0_i32 = arith.constant 0 : i32
    %c0_i32_0 = arith.constant 0 : i32
    %c0_i32_1 = arith.constant 0 : i32
    return %c0_i32, %c0_i32_0 : i32, i32
  }
  func.func @transform_6(%arg0: i32) -> (i32, i32) {
    %c0_i32 = arith.constant 0 : i32
    %c0_i32_0 = arith.constant 0 : i32
    %c0_i32_1 = arith.constant 0 : i32
    return %c0_i32, %c0_i32_0 : i32, i32
  }
  func.func @transform_7(%arg0: i32) -> (i32, i32) {
    %c0_i32 = arith.constant 0 : i32
    %c0_i32_0 = arith.constant 0 : i32
    %c0_i32_1 = arith.constant 0 : i32
    return %c0_i32, %c0_i32_0 : i32, i32
  }
  func.func @transform_8(%arg0: i32) -> (i32, i32) {
    %c0_i32 = arith.constant 0 : i32
    %c0_i32_0 = arith.constant 0 : i32
    %c0_i32_1 = arith.constant 0 : i32
    return %c0_i32, %c0_i32_0 : i32, i32
  }
  func.func @transform_9(%arg0: i32) -> (i32, i32) {
    %c0_i32 = arith.constant 0 : i32
    %c0_i32_0 = arith.constant 0 : i32
    %c0_i32_1 = arith.constant 0 : i32
    return %c0_i32, %c0_i32_0 : i32, i32
  }
  func.func @transform_10(%arg0: i32) -> (i32, i32) {
    %c0_i32 = arith.constant 0 : i32
    %c0_i32_0 = arith.constant 0 : i32
    return %arg0, %c0_i32 : i32, i32
  }
  func.func @transform_11(%arg0: i32) -> (i32, i32, i32) {
    %c0_i32 = arith.constant 0 : i32
    %c0_i32_0 = arith.constant 0 : i32
    %c0_i32_1 = arith.constant 0 : i32
    return %c0_i32, %arg0, %c0_i32_0 : i32, i32, i32
  }
}

</mosaic_0001>

<llo_original>
// kernel: lstm_ae_forward.1
$region0: #{lstm_ae_forward.1}
  #allocation0 [shape = 'u32[]', space=smem, size = 0x4, offset = 0x4, fixed_abs, tag = 'smem constant byte address 0x4 - core index']
  #allocation1 [shape = 'u32[144,128]{1,0:T(1,128)}', space=vmem, size = 0x12000, scoped, tag = 'internal scratch']
  #allocation2 [shape = 'f32[8,2,64]{2,1,0:T(2,128)}', space=vmem, size = 0x2000, scoped, tag = 'scratch operand']
  #allocation3 [shape = 'bf16[2,8,2,16]{3,2,1,0:T(2,128)(2,1)}', space=vmem, size = 0x2000, scoped, tag = 'scratch operand']
  %s0 = inlined_call_operand.vmem [shape: bf16[8,2,8], index: 0, kind: input, shape index: {}]
  %s1 = inlined_call_operand.vmem [shape: bf16[8,64], index: 1, kind: input, shape index: {}]
  %s2 = inlined_call_operand.vmem [shape: f32[1,64], index: 2, kind: input, shape index: {}]
  %s3 = inlined_call_operand.vmem [shape: bf16[16,64], index: 3, kind: input, shape index: {}]
  %s4 = inlined_call_operand.vmem [shape: bf16[16,128], index: 4, kind: input, shape index: {}]
  %s5 = inlined_call_operand.vmem [shape: f32[1,128], index: 5, kind: input, shape index: {}]
  %s6 = inlined_call_operand.vmem [shape: bf16[32,128], index: 6, kind: input, shape index: {}]
  %s7 = inlined_call_operand.vmem [shape: bf16[16,4], index: 7, kind: input, shape index: {}]
  %s8 = inlined_call_operand.vmem [shape: bf16[16,4], index: 8, kind: input, shape index: {}]
  %s9 = inlined_call_operand.vmem [shape: f32[1,4], index: 9, kind: input, shape index: {}]
  %s10 = inlined_call_operand.hbm [shape: f32[2,16], index: 10, kind: output, shape index: {0}]
  %s11 = inlined_call_operand.vmem [shape: f32[8,2,4], index: 11, kind: output, shape index: {1}]
  %12 = xla_tuple %s10, %s11
  %s13 = sld [smem:[#allocation0]]
  $region58: #{lstm_ae_forward.1} parent=0
    _
  %s15 = ssub.s32 1, %s13
  %s16 = scalar_select 0, %s15, %s13
  $region1: #{lstm_ae_forward.1} parent=0
    #allocation4 [shape = 'u8[1024]{0}', space=vmem, size = 0x400, scoped, tag = 'output window, operand 0, single buffered']
    #allocation5 [shape = 's32[1]{0}', space=sflag, size = 0x4, scoped, tag = 'scoped memory for lstm_ae_forward.1']
    %17 = vsyncpa [#allocation5], 0
    // Predicated region
    $region2: #{lstm_ae_forward.1} parent=1 // pred_check
      _
    $region3: #{lstm_ae_forward.1} parent=1 // pred_check_branch
      %19 = sbr.rel (0) target = $region5
    $region4: #{lstm_ae_forward.1} parent=1 // pred_region
      _
    $region5: #{lstm_ae_forward.1} parent=1 // pred_fallthru
      _
    // Predicated region
    $region6: #{lstm_ae_forward.1} parent=1 // pred_check
      _
    $region7: #{lstm_ae_forward.1} parent=1 // pred_check_branch
      %21 = sbr.rel (0) target = $region9
    $region8: #{lstm_ae_forward.1} parent=1 // pred_region
      _
    $region9: #{lstm_ae_forward.1} parent=1 // pred_fallthru
      _
    // Predicated region
    $region10: #{lstm_ae_forward.1} parent=1 // pred_check
      _
    $region11: #{lstm_ae_forward.1} parent=1 // pred_check_branch
      %23 = sbr.rel (0) target = $region13
    $region12: #{lstm_ae_forward.1} parent=1 // pred_region
      _
    $region13: #{lstm_ae_forward.1} parent=1 // pred_fallthru
      _
    // Predicated region
    $region14: #{lstm_ae_forward.1} parent=1 // pred_check
      _
    $region15: #{lstm_ae_forward.1} parent=1 // pred_check_branch
      %25 = sbr.rel (0) target = $region17
    $region16: #{lstm_ae_forward.1} parent=1 // pred_region
      _
    $region17: #{lstm_ae_forward.1} parent=1 // pred_fallthru
      _
    // Predicated region
    $region18: #{lstm_ae_forward.1} parent=1 // pred_check
      _
    $region19: #{lstm_ae_forward.1} parent=1 // pred_check_branch
      %27 = sbr.rel (0) target = $region21
    $region20: #{lstm_ae_forward.1} parent=1 // pred_region
      _
    $region21: #{lstm_ae_forward.1} parent=1 // pred_fallthru
      _
    // Predicated region
    $region22: #{lstm_ae_forward.1} parent=1 // pred_check
      _
    $region23: #{lstm_ae_forward.1} parent=1 // pred_check_branch
      %29 = sbr.rel (0) target = $region25
    $region24: #{lstm_ae_forward.1} parent=1 // pred_region
      _
    $region25: #{lstm_ae_forward.1} parent=1 // pred_fallthru
      _
    // Predicated region
    $region26: #{lstm_ae_forward.1} parent=1 // pred_check
      _
    $region27: #{lstm_ae_forward.1} parent=1 // pred_check_branch
      %31 = sbr.rel (0) target = $region29
    $region28: #{lstm_ae_forward.1} parent=1 // pred_region
      _
    $region29: #{lstm_ae_forward.1} parent=1 // pred_fallthru
      _
    // Predicated region
    $region30: #{lstm_ae_forward.1} parent=1 // pred_check
      _
    $region31: #{lstm_ae_forward.1} parent=1 // pred_check_branch
      %33 = sbr.rel (0) target = $region33
    $region32: #{lstm_ae_forward.1} parent=1 // pred_region
      _
    $region33: #{lstm_ae_forward.1} parent=1 // pred_fallthru
      _
    // Predicated region
    $region34: #{lstm_ae_forward.1} parent=1 // pred_check
      _
    $region35: #{lstm_ae_forward.1} parent=1 // pred_check_branch
      %35 = sbr.rel (0) target = $region37
    $region36: #{lstm_ae_forward.1} parent=1 // pred_region
      _
    $region37: #{lstm_ae_forward.1} parent=1 // pred_fallthru
      _
    // Predicated region
    $region38: #{lstm_ae_forward.1} parent=1 // pred_check
      _
    $region39: #{lstm_ae_forward.1} parent=1 // pred_check_branch
      %37 = sbr.rel (0) target = $region41
    $region40: #{lstm_ae_forward.1} parent=1 // pred_region
      _
    $region41: #{lstm_ae_forward.1} parent=1 // pred_fallthru
      _
    %v39 = vld [vmem:[%s0] sm:$0x1]
    %v40 = vld [vmem:[%s0 + $0x1] sm:$0x1]
    %v41 = vld [vmem:[%s0 + $0x2] sm:$0x1]
    %v42 = vld [vmem:[%s0 + $0x3] sm:$0x1]
    %v43 = vld [vmem:[%s0 + $0x4] sm:$0x1]
    %v44 = vld [vmem:[%s0 + $0x5] sm:$0x1]
    %v45 = vld [vmem:[%s0 + $0x6] sm:$0x1]
    %v46 = vld [vmem:[%s0 + $0x7] sm:$0x1]
    %v47 = vld [vmem:[%s1] sm:$0xf]
    %v48 = vld [vmem:[%s2] sm:$0x1]
    %v50 = vlaneseq
    %v51 = vshrl.u32 %v50, 7
    %v52 = vsub.s32 0, %v51
    %v53 = vrot.slane %v48, %v52
    %v63 = vcombine.low %v39, %v40
    %v64 = vcombine.low %v41, %v42
    %v65 = vcombine.low %v43, %v44
    %v66 = vcombine.low %v45, %v46
    %v68 = vunpack.c.l.s4 1966171168
    %v69 = vunpack.c.0.s8 %v68
    %v70 = vlaneseq
    %v71 = vshrl.u32 %v70, 7
    %v72 = vsub.s32 %v69, %v71
    %v73 = vrot.slane %v63, %v72
    %v75 = vunpack.c.l.s4 1966171168
    %v76 = vunpack.c.0.s8 %v75
    %v77 = vlaneseq
    %v78 = vshrl.u32 %v77, 7
    %v79 = vsub.s32 %v76, %v78
    %v80 = vrot.slane %v64, %v79
    %v82 = vunpack.c.l.s4 1966171168
    %v83 = vunpack.c.0.s8 %v82
    %v84 = vlaneseq
    %v85 = vshrl.u32 %v84, 7
    %v86 = vsub.s32 %v83, %v85
    %v87 = vrot.slane %v65, %v86
    %v89 = vunpack.c.l.s4 1966171168
    %v90 = vunpack.c.0.s8 %v89
    %v91 = vlaneseq
    %v92 = vshrl.u32 %v91, 7
    %v93 = vsub.s32 %v90, %v92
    %v94 = vrot.slane %v66, %v93
    %v95 = vcombine.low %v73, %v80
    %v96 = vcombine.low %v87, %v94
    %v98 = vunpack.c.l.s4 1966171168
    %v99 = vunpack.c.0.s8 %v98
    %v100 = vlaneseq
    %v101 = vshrl.u32 %v100, 7
    %v102 = vsub.s32 %v99, %v101
    %v103 = vrot.slane %v95, %v102
    %v105 = vunpack.c.l.s4 1966171168
    %v106 = vunpack.c.0.s8 %v105
    %v107 = vlaneseq
    %v108 = vshrl.u32 %v107, 7
    %v109 = vsub.s32 %v106, %v108
    %v110 = vrot.slane %v96, %v109
    %v111 = vcombine.low %v103, %v110
    %vm112 = vcmask 64512
    %v114 = vsel %vm112, %v111, 0
    %vm116 = vcmask 1043456
    %v118 = vsel %vm116, %v47, 0
    %120 = vmatprep.subr.bf16.mxu0 0
    %121 = vmatpush1.bf16.msra.mxu0 %v118
    %122 = vmatprep.subr.bf16.mxu0 0
    %123 = vmatpush1.bf16.msra.mxu0 0
    %124 = vmatprep.subr.bf16.mxu0 0
    %125 = vmatpush1.bf16.msra.mxu0 0
    %126 = vmatprep.subr.bf16.mxu0 0
    %127 = vmatpush1.bf16.msra.mxu0 0
    %128 = vmatprep.subr.bf16.mxu0 0
    %129 = vmatpush1.bf16.msra.mxu0 0
    %130 = vmatprep.subr.bf16.mxu0 0
    %131 = vmatpush1.bf16.msra.mxu0 0
    %132 = vmatprep.subr.bf16.mxu0 0
    %133 = vmatpush1.bf16.msra.mxu0 0
    %134 = vmatprep.subr.bf16.mxu0 0
    %135 = vmatpush1.bf16.msra.mxu0 0
    %136 = vmatprep.subr.bf16.mxu0 0
    %137 = vmatpush1.bf16.msra.mxu0 0
    %138 = vmatprep.subr.bf16.mxu0 0
    %139 = vmatpush1.bf16.msra.mxu0 0
    %140 = vmatprep.subr.bf16.mxu0 0
    %141 = vmatpush1.bf16.msra.mxu0 0
    %142 = vmatprep.subr.bf16.mxu0 0
    %143 = vmatpush1.bf16.msra.mxu0 0
    %144 = vmatprep.subr.bf16.mxu0 0
    %145 = vmatpush1.bf16.msra.mxu0 0
    %146 = vmatprep.subr.bf16.mxu0 0
    %147 = vmatpush1.bf16.msra.mxu0 0
    %148 = vmatprep.subr.bf16.mxu0 0
    %149 = vmatpush1.bf16.msra.mxu0 0
    %150 = vmatprep.subr.bf16.mxu0 0
    %151 = vmatpush1.bf16.msra.mxu0 0
    %152 = vmatprep.mubr.bf16.mxu0 0
    %153 = vmatmul.mubr.bf16.gmra.mrb[0].mxu0 %v114
    %v154 = vpop.f32.mrb[0].mxu0
    %v155 = vadd.f32 %v53, %v154
    %v156 = vpop.f32.mrb[0].mxu0
    %v157 = vpop.f32.mrb[0].mxu0
    %v158 = vadd.f32 %v53, %v157
    %v159 = vpop.f32.mrb[0].mxu0
    %160 = vdwg.mxu0
    %v163 = vcombine.high %v155, %v155
    %v165 = vunpack.c.l.s4 1983009808
    %v166 = vunpack.c.0.s8 %v165
    %v167 = vlaneseq
    %v168 = vshrl.u32 %v167, 7
    %v169 = vsub.s32 %v166, %v168
    %v170 = vrot.slane %v155, %v169
    %v172 = vunpack.c.l.s4 1983009808
    %v173 = vunpack.c.0.s8 %v172
    %v174 = vlaneseq
    %v175 = vshrl.u32 %v174, 7
    %v176 = vsub.s32 %v173, %v175
    %v177 = vrot.slane %v163, %v176
    %v178 = vcombine.high %v170, %v170
    %v179 = vcombine.high %v177, %v177
    %v180 = vcombine.high %v158, %v158
    %v182 = vunpack.c.l.s4 1983009808
    %v183 = vunpack.c.0.s8 %v182
    %v184 = vlaneseq
    %v185 = vshrl.u32 %v184, 7
    %v186 = vsub.s32 %v183, %v185
    %v187 = vrot.slane %v158, %v186
    %v189 = vunpack.c.l.s4 1983009808
    %v190 = vunpack.c.0.s8 %v189
    %v191 = vlaneseq
    %v192 = vshrl.u32 %v191, 7
    %v193 = vsub.s32 %v190, %v192
    %v194 = vrot.slane %v180, %v193
    %v195 = vcombine.high %v187, %v187
    %v196 = vcombine.high %v194, %v194
    %vm205 = vcmask 517120
    %206 = vst.msk [vmem:[#allocation2] sm:$0x3] %vm205, %v170
    %207 = vst.msk [vmem:[#allocation2 + $0x2] sm:$0x3] %vm205, %v178
    %208 = vst.msk [vmem:[#allocation2 + $0x4] sm:$0x3] %vm205, %v177
    %209 = vst.msk [vmem:[#allocation2 + $0x6] sm:$0x3] %vm205, %v179
    %210 = vst.msk [vmem:[#allocation2 + $0x8] sm:$0x3] %vm205, %v187
    %211 = vst.msk [vmem:[#allocation2 + $0xa] sm:$0x3] %vm205, %v195
    %212 = vst.msk [vmem:[#allocation2 + $0xc] sm:$0x3] %vm205, %v194
    %213 = vst.msk [vmem:[#allocation2 + $0xe] sm:$0x3] %vm205, %v196
    %v214 = vld [vmem:[%s3] sm:$0xf]
    %v215 = vld [vmem:[%s3 + $0x4] sm:$0xf]
    %v216 = vld [vmem:[#allocation2] sm:$0x3]
    %v219 = vunpack.c.l.b16 %v214
    %v220 = vunpack.c.l.b16 %v215
    %v221 = vpack.c.b16 %v220, %v219
    %vm223 = vcmask 130048
    %v225 = vsel %vm223, 0, 0
    %227 = vmatprep.subr.bf16.mxu0 0
    %228 = vmatpush1.bf16.msra.mxu0 %v221
    %229 = vmatprep.subr.bf16.mxu0 0
    %230 = vmatpush1.bf16.msra.mxu0 0
    %231 = vmatprep.subr.bf16.mxu0 0
    %232 = vmatpush1.bf16.msra.mxu0 0
    %233 = vmatprep.subr.bf16.mxu0 0
    %234 = vmatpush1.bf16.msra.mxu0 0
    %235 = vmatprep.subr.bf16.mxu0 0
    %236 = vmatpush1.bf16.msra.mxu0 0
    %237 = vmatprep.subr.bf16.mxu0 0
    %238 = vmatpush1.bf16.msra.mxu0 0
    %239 = vmatprep.subr.bf16.mxu0 0
    %240 = vmatpush1.bf16.msra.mxu0 0
    %241 = vmatprep.subr.bf16.mxu0 0
    %242 = vmatpush1.bf16.msra.mxu0 0
    %243 = vmatprep.subr.bf16.mxu0 0
    %244 = vmatpush1.bf16.msra.mxu0 0
    %245 = vmatprep.subr.bf16.mxu0 0
    %246 = vmatpush1.bf16.msra.mxu0 0
    %247 = vmatprep.subr.bf16.mxu0 0
    %248 = vmatpush1.bf16.msra.mxu0 0
    %249 = vmatprep.subr.bf16.mxu0 0
    %250 = vmatpush1.bf16.msra.mxu0 0
    %251 = vmatprep.subr.bf16.mxu0 0
    %252 = vmatpush1.bf16.msra.mxu0 0
    %253 = vmatprep.subr.bf16.mxu0 0
    %254 = vmatpush1.bf16.msra.mxu0 0
    %255 = vmatprep.subr.bf16.mxu0 0
    %256 = vmatpush1.bf16.msra.mxu0 0
    %257 = vmatprep.subr.bf16.mxu0 0
    %258 = vmatpush1.bf16.msra.mxu0 0
    %259 = vmatprep.mubr.bf16.mxu0 0
    %260 = vmatmul.mubr.bf16.gmra.mrb[0].mxu0 %v225
    %v261 = vpop.f32.mrb[0].mxu0
    %v262 = vadd.f32 0.0, %v261
    %v263 = vpop.f32.mrb[0].mxu0
    %v264 = vpop.f32.mrb[0].mxu0
    %v265 = vpop.f32.mrb[0].mxu0
    %266 = vdwg.mxu0
    %v267 = vadd.f32 %v216, %v262
    %v268 = vxor.u32 %v267, 2147483648
    %v269 = vmul.f32 %v268, 1.442695
    %v270 = vpow.pop %v269
    %v271 = vadd.f32 %v270, 1.0
    %v272 = vrcp.pop %v271
    %v273 = vmul.f32 1.0, %v272
    %v274 = vtanh.pop %v267
    %v275 = vmul.f32 %v273, 0.0
    %277 = vrot.lane.b32.xlu0 %v274, 80
    %v278 = vpop.permute.xlu0 %277
    %v280 = vmul.f32 %v273, %v278
    %282 = vrot.lane.b32.xlu0 %v280, 16
    %v283 = vpop.permute.xlu0 %282
    %v285 = vadd.f32 %v275, %v283
    %v286 = vtanh.pop %v285
    %288 = vrot.lane.b32.xlu0 %v286, 16
    %v289 = vpop.permute.xlu0 %288
    %v291 = vmul.f32 %v273, %v289
    %v292 = vadd.f32 %v291, 0.0
    %s293 = scalar_lea.vmem [#allocation2], 2
    %v294 = vld [vmem:[%s293] sm:$0x3]
    %v295 = vpack.c.bf16 %v291, %v291
    %297 = vrot.lane.b32.xlu0 %v295, 96
    %v298 = vpop.permute.xlu0 %297
    %v300 = vsel %vm223, %v298, 0
    %302 = vmatprep.subr.bf16.mxu0 0
    %303 = vmatpush1.bf16.msra.mxu0 %v221
    %304 = vmatprep.subr.bf16.mxu0 0
    %305 = vmatpush1.bf16.msra.mxu0 0
    %306 = vmatprep.subr.bf16.mxu0 0
    %307 = vmatpush1.bf16.msra.mxu0 0
    %308 = vmatprep.subr.bf16.mxu0 0
    %309 = vmatpush1.bf16.msra.mxu0 0
    %310 = vmatprep.subr.bf16.mxu0 0
    %311 = vmatpush1.bf16.msra.mxu0 0
    %312 = vmatprep.subr.bf16.mxu0 0
    %313 = vmatpush1.bf16.msra.mxu0 0
    %314 = vmatprep.subr.bf16.mxu0 0
    %315 = vmatpush1.bf16.msra.mxu0 0
    %316 = vmatprep.subr.bf16.mxu0 0
    %317 = vmatpush1.bf16.msra.mxu0 0
    %318 = vmatprep.subr.bf16.mxu0 0
    %319 = vmatpush1.bf16.msra.mxu0 0
    %320 = vmatprep.subr.bf16.mxu0 0
    %321 = vmatpush1.bf16.msra.mxu0 0
    %322 = vmatprep.subr.bf16.mxu0 0
    %323 = vmatpush1.bf16.msra.mxu0 0
    %324 = vmatprep.subr.bf16.mxu0 0
    %325 = vmatpush1.bf16.msra.mxu0 0
    %326 = vmatprep.subr.bf16.mxu0 0
    %327 = vmatpush1.bf16.msra.mxu0 0
    %328 = vmatprep.subr.bf16.mxu0 0
    %329 = vmatpush1.bf16.msra.mxu0 0
    %330 = vmatprep.subr.bf16.mxu0 0
    %331 = vmatpush1.bf16.msra.mxu0 0
    %332 = vmatprep.subr.bf16.mxu0 0
    %333 = vmatpush1.bf16.msra.mxu0 0
    %334 = vmatprep.mubr.bf16.mxu0 0
    %335 = vmatmul.mubr.bf16.gmra.mrb[0].mxu0 %v300
    %v336 = vpop.f32.mrb[0].mxu0
    %v337 = vadd.f32 0.0, %v336
    %v338 = vpop.f32.mrb[0].mxu0
    %v339 = vpop.f32.mrb[0].mxu0
    %v340 = vpop.f32.mrb[0].mxu0
    %341 = vdwg.mxu0
    %v342 = vadd.f32 %v294, %v337
    %v343 = vxor.u32 %v342, 2147483648
    %v344 = vmul.f32 %v343, 1.442695
    %v345 = vpow.pop %v344
    %v346 = vadd.f32 %v345, 1.0
    %v347 = vrcp.pop %v346
    %v348 = vmul.f32 1.0, %v347
    %v349 = vtanh.pop %v342
    %v350 = vmul.f32 %v348, %v285
    %352 = vrot.lane.b32.xlu0 %v349, 80
    %v353 = vpop.permute.xlu0 %352
    %v355 = vmul.f32 %v348, %v353
    %357 = vrot.lane.b32.xlu0 %v355, 16
    %v358 = vpop.permute.xlu0 %357
    %v360 = vadd.f32 %v350, %v358
    %v361 = vtanh.pop %v360
    %363 = vrot.lane.b32.xlu0 %v361, 16
    %v364 = vpop.permute.xlu0 %363
    %v366 = vmul.f32 %v348, %v364
    %v367 = vadd.f32 %v292, %v366
    %s368 = scalar_lea.vmem [#allocation2], 4
    %v369 = vld [vmem:[%s368] sm:$0x3]
    %v370 = vpack.c.bf16 %v366, %v366
    %372 = vrot.lane.b32.xlu0 %v370, 96
    %v373 = vpop.permute.xlu0 %372
    %v375 = vsel %vm223, %v373, 0
    %377 = vmatprep.subr.bf16.mxu0 0
    %378 = vmatpush1.bf16.msra.mxu0 %v221
    %379 = vmatprep.subr.bf16.mxu0 0
    %380 = vmatpush1.bf16.msra.mxu0 0
    %381 = vmatprep.subr.bf16.mxu0 0
    %382 = vmatpush1.bf16.msra.mxu0 0
    %383 = vmatprep.subr.bf16.mxu0 0
    %384 = vmatpush1.bf16.msra.mxu0 0
    %385 = vmatprep.subr.bf16.mxu0 0
    %386 = vmatpush1.bf16.msra.mxu0 0
    %387 = vmatprep.subr.bf16.mxu0 0
    %388 = vmatpush1.bf16.msra.mxu0 0
    %389 = vmatprep.subr.bf16.mxu0 0
    %390 = vmatpush1.bf16.msra.mxu0 0
    %391 = vmatprep.subr.bf16.mxu0 0
    %392 = vmatpush1.bf16.msra.mxu0 0
    %393 = vmatprep.subr.bf16.mxu0 0
    %394 = vmatpush1.bf16.msra.mxu0 0
    %395 = vmatprep.subr.bf16.mxu0 0
    %396 = vmatpush1.bf16.msra.mxu0 0
    %397 = vmatprep.subr.bf16.mxu0 0
    %398 = vmatpush1.bf16.msra.mxu0 0
    %399 = vmatprep.subr.bf16.mxu0 0
    %400 = vmatpush1.bf16.msra.mxu0 0
    %401 = vmatprep.subr.bf16.mxu0 0
    %402 = vmatpush1.bf16.msra.mxu0 0
    %403 = vmatprep.subr.bf16.mxu0 0
    %404 = vmatpush1.bf16.msra.mxu0 0
    %405 = vmatprep.subr.bf16.mxu0 0
    %406 = vmatpush1.bf16.msra.mxu0 0
    %407 = vmatprep.subr.bf16.mxu0 0
    %408 = vmatpush1.bf16.msra.mxu0 0
    %409 = vmatprep.mubr.bf16.mxu0 0
    %410 = vmatmul.mubr.bf16.gmra.mrb[0].mxu0 %v375
    %v411 = vpop.f32.mrb[0].mxu0
    %v412 = vadd.f32 0.0, %v411
    %v413 = vpop.f32.mrb[0].mxu0
    %v414 = vpop.f32.mrb[0].mxu0
    %v415 = vpop.f32.mrb[0].mxu0
    %416 = vdwg.mxu0
    %v417 = vadd.f32 %v369, %v412
    %v418 = vxor.u32 %v417, 2147483648
    %v419 = vmul.f32 %v418, 1.442695
    %v420 = vpow.pop %v419
    %v421 = vadd.f32 %v420, 1.0
    %v422 = vrcp.pop %v421
    %v423 = vmul.f32 1.0, %v422
    %v424 = vtanh.pop %v417
    %v425 = vmul.f32 %v423, %v360
    %427 = vrot.lane.b32.xlu0 %v424, 80
    %v428 = vpop.permute.xlu0 %427
    %v430 = vmul.f32 %v423, %v428
    %432 = vrot.lane.b32.xlu0 %v430, 16
    %v433 = vpop.permute.xlu0 %432
    %v435 = vadd.f32 %v425, %v433
    %v436 = vtanh.pop %v435
    %438 = vrot.lane.b32.xlu0 %v436, 16
    %v439 = vpop.permute.xlu0 %438
    %v441 = vmul.f32 %v423, %v439
    %v442 = vadd.f32 %v367, %v441
    %s443 = scalar_lea.vmem [#allocation2], 6
    %v444 = vld [vmem:[%s443] sm:$0x3]
    %v445 = vpack.c.bf16 %v441, %v441
    %447 = vrot.lane.b32.xlu0 %v445, 96
    %v448 = vpop.permute.xlu0 %447
    %v450 = vsel %vm223, %v448, 0
    %452 = vmatprep.subr.bf16.mxu0 0
    %453 = vmatpush1.bf16.msra.mxu0 %v221
    %454 = vmatprep.subr.bf16.mxu0 0
    %455 = vmatpush1.bf16.msra.mxu0 0
    %456 = vmatprep.subr.bf16.mxu0 0
    %457 = vmatpush1.bf16.msra.mxu0 0
    %458 = vmatprep.subr.bf16.mxu0 0
    %459 = vmatpush1.bf16.msra.mxu0 0
    %460 = vmatprep.subr.bf16.mxu0 0
    %461 = vmatpush1.bf16.msra.mxu0 0
    %462 = vmatprep.subr.bf16.mxu0 0
    %463 = vmatpush1.bf16.msra.mxu0 0
    %464 = vmatprep.subr.bf16.mxu0 0
    %465 = vmatpush1.bf16.msra.mxu0 0
    %466 = vmatprep.subr.bf16.mxu0 0
    %467 = vmatpush1.bf16.msra.mxu0 0
    %468 = vmatprep.subr.bf16.mxu0 0
    %469 = vmatpush1.bf16.msra.mxu0 0
    %470 = vmatprep.subr.bf16.mxu0 0
    %471 = vmatpush1.bf16.msra.mxu0 0
    %472 = vmatprep.subr.bf16.mxu0 0
    %473 = vmatpush1.bf16.msra.mxu0 0
    %474 = vmatprep.subr.bf16.mxu0 0
    %475 = vmatpush1.bf16.msra.mxu0 0
    %476 = vmatprep.subr.bf16.mxu0 0
    %477 = vmatpush1.bf16.msra.mxu0 0
    %478 = vmatprep.subr.bf16.mxu0 0
    %479 = vmatpush1.bf16.msra.mxu0 0
    %480 = vmatprep.subr.bf16.mxu0 0
    %481 = vmatpush1.bf16.msra.mxu0 0
    %482 = vmatprep.subr.bf16.mxu0 0
    %483 = vmatpush1.bf16.msra.mxu0 0
    %484 = vmatprep.mubr.bf16.mxu0 0
    %485 = vmatmul.mubr.bf16.gmra.mrb[0].mxu0 %v450
    %v486 = vpop.f32.mrb[0].mxu0
    %v487 = vadd.f32 0.0, %v486
    %v488 = vpop.f32.mrb[0].mxu0
    %v489 = vpop.f32.mrb[0].mxu0
    %v490 = vpop.f32.mrb[0].mxu0
    %491 = vdwg.mxu0
    %v492 = vadd.f32 %v444, %v487
    %v493 = vxor.u32 %v492, 2147483648
    %v494 = vmul.f32 %v493, 1.442695
    %v495 = vpow.pop %v494
    %v496 = vadd.f32 %v495, 1.0
    %v497 = vrcp.pop %v496
    %v498 = vmul.f32 1.0, %v497
    %v499 = vtanh.pop %v492
    %v500 = vmul.f32 %v498, %v435
    %502 = vrot.lane.b32.xlu0 %v499, 80
    %v503 = vpop.permute.xlu0 %502
    %v505 = vmul.f32 %v498, %v503
    %507 = vrot.lane.b32.xlu0 %v505, 16
    %v508 = vpop.permute.xlu0 %507
    %v510 = vadd.f32 %v500, %v508
    %v511 = vtanh.pop %v510
    %513 = vrot.lane.b32.xlu0 %v511, 16
    %v514 = vpop.permute.xlu0 %513
    %v516 = vmul.f32 %v498, %v514
    %v517 = vadd.f32 %v442, %v516
    %s518 = scalar_lea.vmem [#allocation2], 8
    %v519 = vld [vmem:[%s518] sm:$0x3]
    %v520 = vpack.c.bf16 %v516, %v516
    %522 = vrot.lane.b32.xlu0 %v520, 96
    %v523 = vpop.permute.xlu0 %522
    %v525 = vsel %vm223, %v523, 0
    %527 = vmatprep.subr.bf16.mxu0 0
    %528 = vmatpush1.bf16.msra.mxu0 %v221
    %529 = vmatprep.subr.bf16.mxu0 0
    %530 = vmatpush1.bf16.msra.mxu0 0
    %531 = vmatprep.subr.bf16.mxu0 0
    %532 = vmatpush1.bf16.msra.mxu0 0
    %533 = vmatprep.subr.bf16.mxu0 0
    %534 = vmatpush1.bf16.msra.mxu0 0
    %535 = vmatprep.subr.bf16.mxu0 0
    %536 = vmatpush1.bf16.msra.mxu0 0
    %537 = vmatprep.subr.bf16.mxu0 0
    %538 = vmatpush1.bf16.msra.mxu0 0
    %539 = vmatprep.subr.bf16.mxu0 0
    %540 = vmatpush1.bf16.msra.mxu0 0
    %541 = vmatprep.subr.bf16.mxu0 0
    %542 = vmatpush1.bf16.msra.mxu0 0
    %543 = vmatprep.subr.bf16.mxu0 0
    %544 = vmatpush1.bf16.msra.mxu0 0
    %545 = vmatprep.subr.bf16.mxu0 0
    %546 = vmatpush1.bf16.msra.mxu0 0
    %547 = vmatprep.subr.bf16.mxu0 0
    %548 = vmatpush1.bf16.msra.mxu0 0
    %549 = vmatprep.subr.bf16.mxu0 0
    %550 = vmatpush1.bf16.msra.mxu0 0
    %551 = vmatprep.subr.bf16.mxu0 0
    %552 = vmatpush1.bf16.msra.mxu0 0
    %553 = vmatprep.subr.bf16.mxu0 0
    %554 = vmatpush1.bf16.msra.mxu0 0
    %555 = vmatprep.subr.bf16.mxu0 0
    %556 = vmatpush1.bf16.msra.mxu0 0
    %557 = vmatprep.subr.bf16.mxu0 0
    %558 = vmatpush1.bf16.msra.mxu0 0
    %559 = vmatprep.mubr.bf16.mxu0 0
    %560 = vmatmul.mubr.bf16.gmra.mrb[0].mxu0 %v525
    %v561 = vpop.f32.mrb[0].mxu0
    %v562 = vadd.f32 0.0, %v561
    %v563 = vpop.f32.mrb[0].mxu0
    %v564 = vpop.f32.mrb[0].mxu0
    %v565 = vpop.f32.mrb[0].mxu0
    %566 = vdwg.mxu0
    %v567 = vadd.f32 %v519, %v562
    %v568 = vxor.u32 %v567, 2147483648
    %v569 = vmul.f32 %v568, 1.442695
    %v570 = vpow.pop %v569
    %v571 = vadd.f32 %v570, 1.0
    %v572 = vrcp.pop %v571
    %v573 = vmul.f32 1.0, %v572
    %v574 = vtanh.pop %v567
    %v575 = vmul.f32 %v573, %v510
    %577 = vrot.lane.b32.xlu0 %v574, 80
    %v578 = vpop.permute.xlu0 %577
    %v580 = vmul.f32 %v573, %v578
    %582 = vrot.lane.b32.xlu0 %v580, 16
    %v583 = vpop.permute.xlu0 %582
    %v585 = vadd.f32 %v575, %v583
    %v586 = vtanh.pop %v585
    %588 = vrot.lane.b32.xlu0 %v586, 16
    %v589 = vpop.permute.xlu0 %588
    %v591 = vmul.f32 %v573, %v589
    %v592 = vadd.f32 %v517, %v591
    %s593 = scalar_lea.vmem [#allocation2], 10
    %v594 = vld [vmem:[%s593] sm:$0x3]
    %v595 = vpack.c.bf16 %v591, %v591
    %597 = vrot.lane.b32.xlu0 %v595, 96
    %v598 = vpop.permute.xlu0 %597
    %v600 = vsel %vm223, %v598, 0
    %602 = vmatprep.subr.bf16.mxu0 0
    %603 = vmatpush1.bf16.msra.mxu0 %v221
    %604 = vmatprep.subr.bf16.mxu0 0
    %605 = vmatpush1.bf16.msra.mxu0 0
    %606 = vmatprep.subr.bf16.mxu0 0
    %607 = vmatpush1.bf16.msra.mxu0 0
    %608 = vmatprep.subr.bf16.mxu0 0
    %609 = vmatpush1.bf16.msra.mxu0 0
    %610 = vmatprep.subr.bf16.mxu0 0
    %611 = vmatpush1.bf16.msra.mxu0 0
    %612 = vmatprep.subr.bf16.mxu0 0
    %613 = vmatpush1.bf16.msra.mxu0 0
    %614 = vmatprep.subr.bf16.mxu0 0
    %615 = vmatpush1.bf16.msra.mxu0 0
    %616 = vmatprep.subr.bf16.mxu0 0
    %617 = vmatpush1.bf16.msra.mxu0 0
    %618 = vmatprep.subr.bf16.mxu0 0
    %619 = vmatpush1.bf16.msra.mxu0 0
    %620 = vmatprep.subr.bf16.mxu0 0
    %621 = vmatpush1.bf16.msra.mxu0 0
    %622 = vmatprep.subr.bf16.mxu0 0
    %623 = vmatpush1.bf16.msra.mxu0 0
    %624 = vmatprep.subr.bf16.mxu0 0
    %625 = vmatpush1.bf16.msra.mxu0 0
    %626 = vmatprep.subr.bf16.mxu0 0
    %627 = vmatpush1.bf16.msra.mxu0 0
    %628 = vmatprep.subr.bf16.mxu0 0
    %629 = vmatpush1.bf16.msra.mxu0 0
    %630 = vmatprep.subr.bf16.mxu0 0
    %631 = vmatpush1.bf16.msra.mxu0 0
    %632 = vmatprep.subr.bf16.mxu0 0
    %633 = vmatpush1.bf16.msra.mxu0 0
    %634 = vmatprep.mubr.bf16.mxu0 0
    %635 = vmatmul.mubr.bf16.gmra.mrb[0].mxu0 %v600
    %v636 = vpop.f32.mrb[0].mxu0
    %v637 = vadd.f32 0.0, %v636
    %v638 = vpop.f32.mrb[0].mxu0
    %v639 = vpop.f32.mrb[0].mxu0
    %v640 = vpop.f32.mrb[0].mxu0
    %641 = vdwg.mxu0
    %v642 = vadd.f32 %v594, %v637
    %v643 = vxor.u32 %v642, 2147483648
    %v644 = vmul.f32 %v643, 1.442695
    %v645 = vpow.pop %v644
    %v646 = vadd.f32 %v645, 1.0
    %v647 = vrcp.pop %v646
    %v648 = vmul.f32 1.0, %v647
    %v649 = vtanh.pop %v642
    %v650 = vmul.f32 %v648, %v585
    %652 = vrot.lane.b32.xlu0 %v649, 80
    %v653 = vpop.permute.xlu0 %652
    %v655 = vmul.f32 %v648, %v653
    %657 = vrot.lane.b32.xlu0 %v655, 16
    %v658 = vpop.permute.xlu0 %657
    %v660 = vadd.f32 %v650, %v658
    %v661 = vtanh.pop %v660
    %663 = vrot.lane.b32.xlu0 %v661, 16
    %v664 = vpop.permute.xlu0 %663
    %v666 = vmul.f32 %v648, %v664
    %v667 = vadd.f32 %v592, %v666
    %s668 = scalar_lea.vmem [#allocation2], 12
    %v669 = vld [vmem:[%s668] sm:$0x3]
    %v670 = vpack.c.bf16 %v666, %v666
    %672 = vrot.lane.b32.xlu0 %v670, 96
    %v673 = vpop.permute.xlu0 %672
    %v675 = vsel %vm223, %v673, 0
    %677 = vmatprep.subr.bf16.mxu0 0
    %678 = vmatpush1.bf16.msra.mxu0 %v221
    %679 = vmatprep.subr.bf16.mxu0 0
    %680 = vmatpush1.bf16.msra.mxu0 0
    %681 = vmatprep.subr.bf16.mxu0 0
    %682 = vmatpush1.bf16.msra.mxu0 0
    %683 = vmatprep.subr.bf16.mxu0 0
    %684 = vmatpush1.bf16.msra.mxu0 0
    %685 = vmatprep.subr.bf16.mxu0 0
    %686 = vmatpush1.bf16.msra.mxu0 0
    %687 = vmatprep.subr.bf16.mxu0 0
    %688 = vmatpush1.bf16.msra.mxu0 0
    %689 = vmatprep.subr.bf16.mxu0 0
    %690 = vmatpush1.bf16.msra.mxu0 0
    %691 = vmatprep.subr.bf16.mxu0 0
    %692 = vmatpush1.bf16.msra.mxu0 0
    %693 = vmatprep.subr.bf16.mxu0 0
    %694 = vmatpush1.bf16.msra.mxu0 0
    %695 = vmatprep.subr.bf16.mxu0 0
    %696 = vmatpush1.bf16.msra.mxu0 0
    %697 = vmatprep.subr.bf16.mxu0 0
    %698 = vmatpush1.bf16.msra.mxu0 0
    %699 = vmatprep.subr.bf16.mxu0 0
    %700 = vmatpush1.bf16.msra.mxu0 0
    %701 = vmatprep.subr.bf16.mxu0 0
    %702 = vmatpush1.bf16.msra.mxu0 0
    %703 = vmatprep.subr.bf16.mxu0 0
    %704 = vmatpush1.bf16.msra.mxu0 0
    %705 = vmatprep.subr.bf16.mxu0 0
    %706 = vmatpush1.bf16.msra.mxu0 0
    %707 = vmatprep.subr.bf16.mxu0 0
    %708 = vmatpush1.bf16.msra.mxu0 0
    %709 = vmatprep.mubr.bf16.mxu0 0
    %710 = vmatmul.mubr.bf16.gmra.mrb[0].mxu0 %v675
    %v711 = vpop.f32.mrb[0].mxu0
    %v712 = vadd.f32 0.0, %v711
    %v713 = vpop.f32.mrb[0].mxu0
    %v714 = vpop.f32.mrb[0].mxu0
    %v715 = vpop.f32.mrb[0].mxu0
    %716 = vdwg.mxu0
    %v717 = vadd.f32 %v669, %v712
    %v718 = vxor.u32 %v717, 2147483648
    %v719 = vmul.f32 %v718, 1.442695
    %v720 = vpow.pop %v719
    %v721 = vadd.f32 %v720, 1.0
    %v722 = vrcp.pop %v721
    %v723 = vmul.f32 1.0, %v722
    %v724 = vtanh.pop %v717
    %v725 = vmul.f32 %v723, %v660
    %727 = vrot.lane.b32.xlu0 %v724, 80
    %v728 = vpop.permute.xlu0 %727
    %v730 = vmul.f32 %v723, %v728
    %732 = vrot.lane.b32.xlu0 %v730, 16
    %v733 = vpop.permute.xlu0 %732
    %v735 = vadd.f32 %v725, %v733
    %v736 = vtanh.pop %v735
    %738 = vrot.lane.b32.xlu0 %v736, 16
    %v739 = vpop.permute.xlu0 %738
    %v741 = vmul.f32 %v723, %v739
    %v742 = vadd.f32 %v667, %v741
    %s743 = scalar_lea.vmem [#allocation2], 14
    %v744 = vld [vmem:[%s743] sm:$0x3]
    %v745 = vpack.c.bf16 %v741, %v741
    %747 = vrot.lane.b32.xlu0 %v745, 96
    %v748 = vpop.permute.xlu0 %747
    %v750 = vsel %vm223, %v748, 0
    %752 = vmatprep.subr.bf16.mxu0 0
    %753 = vmatpush1.bf16.msra.mxu0 %v221
    %754 = vmatprep.subr.bf16.mxu0 0
    %755 = vmatpush1.bf16.msra.mxu0 0
    %756 = vmatprep.subr.bf16.mxu0 0
    %757 = vmatpush1.bf16.msra.mxu0 0
    %758 = vmatprep.subr.bf16.mxu0 0
    %759 = vmatpush1.bf16.msra.mxu0 0
    %760 = vmatprep.subr.bf16.mxu0 0
    %761 = vmatpush1.bf16.msra.mxu0 0
    %762 = vmatprep.subr.bf16.mxu0 0
    %763 = vmatpush1.bf16.msra.mxu0 0
    %764 = vmatprep.subr.bf16.mxu0 0
    %765 = vmatpush1.bf16.msra.mxu0 0
    %766 = vmatprep.subr.bf16.mxu0 0
    %767 = vmatpush1.bf16.msra.mxu0 0
    %768 = vmatprep.subr.bf16.mxu0 0
    %769 = vmatpush1.bf16.msra.mxu0 0
    %770 = vmatprep.subr.bf16.mxu0 0
    %771 = vmatpush1.bf16.msra.mxu0 0
    %772 = vmatprep.subr.bf16.mxu0 0
    %773 = vmatpush1.bf16.msra.mxu0 0
    %774 = vmatprep.subr.bf16.mxu0 0
    %775 = vmatpush1.bf16.msra.mxu0 0
    %776 = vmatprep.subr.bf16.mxu0 0
    %777 = vmatpush1.bf16.msra.mxu0 0
    %778 = vmatprep.subr.bf16.mxu0 0
    %779 = vmatpush1.bf16.msra.mxu0 0
    %780 = vmatprep.subr.bf16.mxu0 0
    %781 = vmatpush1.bf16.msra.mxu0 0
    %782 = vmatprep.subr.bf16.mxu0 0
    %783 = vmatpush1.bf16.msra.mxu0 0
    %784 = vmatprep.mubr.bf16.mxu0 0
    %785 = vmatmul.mubr.bf16.gmra.mrb[0].mxu0 %v750
    %v786 = vpop.f32.mrb[0].mxu0
    %v787 = vadd.f32 0.0, %v786
    %v788 = vpop.f32.mrb[0].mxu0
    %v789 = vpop.f32.mrb[0].mxu0
    %v790 = vpop.f32.mrb[0].mxu0
    %791 = vdwg.mxu0
    %v792 = vadd.f32 %v744, %v787
    %v793 = vxor.u32 %v792, 2147483648
    %v794 = vmul.f32 %v793, 1.442695
    %v795 = vpow.pop %v794
    %v796 = vadd.f32 %v795, 1.0
    %v797 = vrcp.pop %v796
    %v798 = vmul.f32 1.0, %v797
    %v799 = vtanh.pop %v792
    %v800 = vmul.f32 %v798, %v735
    %802 = vrot.lane.b32.xlu0 %v799, 80
    %v803 = vpop.permute.xlu0 %802
    %v805 = vmul.f32 %v798, %v803
    %807 = vrot.lane.b32.xlu0 %v805, 16
    %v808 = vpop.permute.xlu0 %807
    %v810 = vadd.f32 %v800, %v808
    %v811 = vtanh.pop %v810
    %813 = vrot.lane.b32.xlu0 %v811, 16
    %v814 = vpop.permute.xlu0 %813
    %v816 = vmul.f32 %v798, %v814
    %v817 = vadd.f32 %v742, %v816
    %v818 = vmul.f32 %v817, 0.125
    %820 = vrot.lane.b32.xlu0 %v818, 96
    %v821 = vpop.permute.xlu0 %820
    %vm823 = vcmask 123904
    %824 = vst.msk [vmem:[#allocation4] sm:$0x3] %vm823, %v821
    %v825 = vpack.c.bf16 %v818, %v818
    %v826 = vld [vmem:[%s4] sm:$0xf]
    %v827 = vld [vmem:[%s4 + $0x4] sm:$0xf]
    %v828 = vld [vmem:[%s5] sm:$0x1]
    %v830 = vlaneseq
    %v831 = vshrl.u32 %v830, 7
    %v832 = vsub.s32 0, %v831
    %v833 = vrot.slane %v828, %v832
    %836 = vrot.lane.b32.xlu0 %v825, 96
    %v837 = vpop.permute.xlu0 %836
    %v840 = vunpack.c.l.b16 %v826
    %v841 = vunpack.c.l.b16 %v827
    %v842 = vpack.c.b16 %v841, %v840
    %v845 = vsel %vm223, %v837, 0
    %847 = vmatprep.subr.bf16.mxu0 0
    %848 = vmatpush1.bf16.msra.mxu0 %v842
    %849 = vmatprep.subr.bf16.mxu0 0
    %850 = vmatpush1.bf16.msra.mxu0 0
    %851 = vmatprep.subr.bf16.mxu0 0
    %852 = vmatpush1.bf16.msra.mxu0 0
    %853 = vmatprep.subr.bf16.mxu0 0
    %854 = vmatpush1.bf16.msra.mxu0 0
    %855 = vmatprep.subr.bf16.mxu0 0
    %856 = vmatpush1.bf16.msra.mxu0 0
    %857 = vmatprep.subr.bf16.mxu0 0
    %858 = vmatpush1.bf16.msra.mxu0 0
    %859 = vmatprep.subr.bf16.mxu0 0
    %860 = vmatpush1.bf16.msra.mxu0 0
    %861 = vmatprep.subr.bf16.mxu0 0
    %862 = vmatpush1.bf16.msra.mxu0 0
    %863 = vmatprep.subr.bf16.mxu0 0
    %864 = vmatpush1.bf16.msra.mxu0 0
    %865 = vmatprep.subr.bf16.mxu0 0
    %866 = vmatpush1.bf16.msra.mxu0 0
    %867 = vmatprep.subr.bf16.mxu0 0
    %868 = vmatpush1.bf16.msra.mxu0 0
    %869 = vmatprep.subr.bf16.mxu0 0
    %870 = vmatpush1.bf16.msra.mxu0 0
    %871 = vmatprep.subr.bf16.mxu0 0
    %872 = vmatpush1.bf16.msra.mxu0 0
    %873 = vmatprep.subr.bf16.mxu0 0
    %874 = vmatpush1.bf16.msra.mxu0 0
    %875 = vmatprep.subr.bf16.mxu0 0
    %876 = vmatpush1.bf16.msra.mxu0 0
    %877 = vmatprep.subr.bf16.mxu0 0
    %878 = vmatpush1.bf16.msra.mxu0 0
    %879 = vmatprep.mubr.bf16.mxu0 0
    %880 = vmatmul.mubr.bf16.gmra.mrb[0].mxu0 %v845
    %v881 = vpop.f32.mrb[0].mxu0
    %v882 = vadd.f32 %v833, %v881
    %v883 = vpop.f32.mrb[0].mxu0
    %v884 = vpop.f32.mrb[0].mxu0
    %v885 = vpop.f32.mrb[0].mxu0
    %886 = vdwg.mxu0
    %v887 = vld [vmem:[%s6] sm:$0xf]
    %v888 = vld [vmem:[%s6 + $0x4] sm:$0xf]
    %v889 = vld [vmem:[%s6 + $0x8] sm:$0xf]
    %v890 = vld [vmem:[%s6 + $0xc] sm:$0xf]
    %v895 = vunpack.c.l.b16 %v887
    %v896 = vunpack.c.l.b16 %v888
    %v897 = vunpack.c.l.b16 %v889
    %v898 = vunpack.c.l.b16 %v890
    %v899 = vpack.c.b16 %v896, %v895
    %v900 = vpack.c.b16 %v898, %v897
    %vm903 = vcmask 261120
    %v904 = vsel %vm903, 0, 0
    %906 = vmatprep.subr.bf16.mxu0 0
    %907 = vmatpush1.bf16.msra.mxu0 %v899
    %908 = vmatprep.subr.bf16.mxu0 0
    %909 = vmatpush1.bf16.msra.mxu0 %v900
    %910 = vmatprep.subr.bf16.mxu0 0
    %911 = vmatpush1.bf16.msra.mxu0 0
    %912 = vmatprep.subr.bf16.mxu0 0
    %913 = vmatpush1.bf16.msra.mxu0 0
    %914 = vmatprep.subr.bf16.mxu0 0
    %915 = vmatpush1.bf16.msra.mxu0 0
    %916 = vmatprep.subr.bf16.mxu0 0
    %917 = vmatpush1.bf16.msra.mxu0 0
    %918 = vmatprep.subr.bf16.mxu0 0
    %919 = vmatpush1.bf16.msra.mxu0 0
    %920 = vmatprep.subr.bf16.mxu0 0
    %921 = vmatpush1.bf16.msra.mxu0 0
    %922 = vmatprep.subr.bf16.mxu0 0
    %923 = vmatpush1.bf16.msra.mxu0 0
    %924 = vmatprep.subr.bf16.mxu0 0
    %925 = vmatpush1.bf16.msra.mxu0 0
    %926 = vmatprep.subr.bf16.mxu0 0
    %927 = vmatpush1.bf16.msra.mxu0 0
    %928 = vmatprep.subr.bf16.mxu0 0
    %929 = vmatpush1.bf16.msra.mxu0 0
    %930 = vmatprep.subr.bf16.mxu0 0
    %931 = vmatpush1.bf16.msra.mxu0 0
    %932 = vmatprep.subr.bf16.mxu0 0
    %933 = vmatpush1.bf16.msra.mxu0 0
    %934 = vmatprep.subr.bf16.mxu0 0
    %935 = vmatpush1.bf16.msra.mxu0 0
    %936 = vmatprep.subr.bf16.mxu0 0
    %937 = vmatpush1.bf16.msra.mxu0 0
    %938 = vmatprep.mubr.bf16.mxu0 0
    %939 = vmatmul.mubr.bf16.gmra.mrb[0].mxu0 %v904
    %v940 = vpop.f32.mrb[0].mxu0
    %v941 = vadd.f32 0.0, %v940
    %v942 = vpop.f32.mrb[0].mxu0
    %v943 = vpop.f32.mrb[0].mxu0
    %v944 = vpop.f32.mrb[0].mxu0
    %945 = vdwg.mxu0
    %v946 = vadd.f32 %v882, %v941
    %v947 = vxor.u32 %v946, 2147483648
    %v948 = vmul.f32 %v947, 1.442695
    %v949 = vpow.pop %v948
    %v950 = vadd.f32 %v949, 1.0
    %v951 = vrcp.pop %v950
    %v952 = vmul.f32 1.0, %v951
    %v953 = vtanh.pop %v946
    %v954 = vmul.f32 %v952, 0.0
    %956 = vrot.lane.b32.xlu0 %v953, 32
    %v957 = vpop.permute.xlu0 %956
    %v959 = vmul.f32 %v952, %v957
    %961 = vrot.lane.b32.xlu0 %v959, 32
    %v962 = vpop.permute.xlu0 %961
    %v964 = vadd.f32 %v954, %v962
    %v965 = vtanh.pop %v964
    %967 = vrot.lane.b32.xlu0 %v965, 32
    %v968 = vpop.permute.xlu0 %967
    %v970 = vmul.f32 %v952, %v968
    %v971 = vpack.c.bf16 %v970, %v970
    %v974 = vunpack.c.l.s4 1966171168
    %v975 = vunpack.c.0.s8 %v974
    %v976 = vlaneseq
    %v977 = vshrl.u32 %v976, 7
    %v978 = vsub.s32 %v975, %v977
    %v979 = vrot.slane %v971, %v978
    %v981 = vunpack.c.l.s4 1966171168
    %v982 = vunpack.c.0.s8 %v981
    %v983 = vlaneseq
    %v984 = vshrl.u32 %v983, 7
    %v985 = vsub.s32 %v982, %v984
    %v986 = vrot.slane %v979, %v985
    %987 = vrot.lane.b32.xlu0 %v986, 64
    %v988 = vpop.permute.xlu0 %987
    %vm990 = vcmask 122880
    %991 = vst.msk [vmem:[#allocation3] sm:$0x1] %vm990, %v988
    %992 = vrot.lane.b32.xlu0 %v986, 48
    %v993 = vpop.permute.xlu0 %992
    %s995 = scalar_lea.vmem [#allocation3], 15
    %996 = vst.msk [vmem:[%s995] sm:$0x1] %vm990, %v993
    %997 = vrot.lane.b32.xlu0 %v971, 64
    %v998 = vpop.permute.xlu0 %997
    %v1000 = vsel %vm903, %v998, 0
    %1002 = vmatprep.subr.bf16.mxu0 0
    %1003 = vmatpush1.bf16.msra.mxu0 %v899
    %1004 = vmatprep.subr.bf16.mxu0 0
    %1005 = vmatpush1.bf16.msra.mxu0 %v900
    %1006 = vmatprep.subr.bf16.mxu0 0
    %1007 = vmatpush1.bf16.msra.mxu0 0
    %1008 = vmatprep.subr.bf16.mxu0 0
    %1009 = vmatpush1.bf16.msra.mxu0 0
    %1010 = vmatprep.subr.bf16.mxu0 0
    %1011 = vmatpush1.bf16.msra.mxu0 0
    %1012 = vmatprep.subr.bf16.mxu0 0
    %1013 = vmatpush1.bf16.msra.mxu0 0
    %1014 = vmatprep.subr.bf16.mxu0 0
    %1015 = vmatpush1.bf16.msra.mxu0 0
    %1016 = vmatprep.subr.bf16.mxu0 0
    %1017 = vmatpush1.bf16.msra.mxu0 0
    %1018 = vmatprep.subr.bf16.mxu0 0
    %1019 = vmatpush1.bf16.msra.mxu0 0
    %1020 = vmatprep.subr.bf16.mxu0 0
    %1021 = vmatpush1.bf16.msra.mxu0 0
    %1022 = vmatprep.subr.bf16.mxu0 0
    %1023 = vmatpush1.bf16.msra.mxu0 0
    %1024 = vmatprep.subr.bf16.mxu0 0
    %1025 = vmatpush1.bf16.msra.mxu0 0
    %1026 = vmatprep.subr.bf16.mxu0 0
    %1027 = vmatpush1.bf16.msra.mxu0 0
    %1028 = vmatprep.subr.bf16.mxu0 0
    %1029 = vmatpush1.bf16.msra.mxu0 0
    %1030 = vmatprep.subr.bf16.mxu0 0
    %1031 = vmatpush1.bf16.msra.mxu0 0
    %1032 = vmatprep.subr.bf16.mxu0 0
    %1033 = vmatpush1.bf16.msra.mxu0 0
    %1034 = vmatprep.mubr.bf16.mxu0 0
    %1035 = vmatmul.mubr.bf16.gmra.mrb[0].mxu0 %v1000
    %v1036 = vpop.f32.mrb[0].mxu0
    %v1037 = vadd.f32 0.0, %v1036
    %v1038 = vpop.f32.mrb[0].mxu0
    %v1039 = vpop.f32.mrb[0].mxu0
    %v1040 = vpop.f32.mrb[0].mxu0
    %1041 = vdwg.mxu0
    %v1042 = vadd.f32 %v882, %v1037
    %v1043 = vxor.u32 %v1042, 2147483648
    %v1044 = vmul.f32 %v1043, 1.442695
    %v1045 = vpow.pop %v1044
    %v1046 = vadd.f32 %v1045, 1.0
    %v1047 = vrcp.pop %v1046
    %v1048 = vmul.f32 1.0, %v1047
    %v1049 = vtanh.pop %v1042
    %v1050 = vmul.f32 %v1048, %v964
    %1052 = vrot.lane.b32.xlu0 %v1049, 32
    %v1053 = vpop.permute.xlu0 %1052
    %v1055 = vmul.f32 %v1048, %v1053
    %1057 = vrot.lane.b32.xlu0 %v1055, 32
    %v1058 = vpop.permute.xlu0 %1057
    %v1060 = vadd.f32 %v1050, %v1058
    %v1061 = vtanh.pop %v1060
    %1063 = vrot.lane.b32.xlu0 %v1061, 32
    %v1064 = vpop.permute.xlu0 %1063
    %v1066 = vmul.f32 %v1048, %v1064
    %v1067 = vpack.c.bf16 %v1066, %v1066
    %v1070 = vunpack.c.l.s4 1966171168
    %v1071 = vunpack.c.0.s8 %v1070
    %v1072 = vlaneseq
    %v1073 = vshrl.u32 %v1072, 7
    %v1074 = vsub.s32 %v1071, %v1073
    %v1075 = vrot.slane %v1067, %v1074
    %v1077 = vunpack.c.l.s4 1966171168
    %v1078 = vunpack.c.0.s8 %v1077
    %v1079 = vlaneseq
    %v1080 = vshrl.u32 %v1079, 7
    %v1081 = vsub.s32 %v1078, %v1080
    %v1082 = vrot.slane %v1075, %v1081
    %1083 = vrot.lane.b32.xlu0 %v1082, 64
    %v1084 = vpop.permute.xlu0 %1083
    %s1086 = scalar_lea.vmem [#allocation3], 1
    %1087 = vst.msk [vmem:[%s1086] sm:$0x1] %vm990, %v1084
    %1088 = vrot.lane.b32.xlu0 %v1082, 48
    %v1089 = vpop.permute.xlu0 %1088
    %s1091 = scalar_lea.vmem [#allocation3], 14
    %1092 = vst.msk [vmem:[%s1091] sm:$0x1] %vm990, %v1089
    %1093 = vrot.lane.b32.xlu0 %v1067, 64
    %v1094 = vpop.permute.xlu0 %1093
    %v1096 = vsel %vm903, %v1094, 0
    %1098 = vmatprep.subr.bf16.mxu0 0
    %1099 = vmatpush1.bf16.msra.mxu0 %v899
    %1100 = vmatprep.subr.bf16.mxu0 0
    %1101 = vmatpush1.bf16.msra.mxu0 %v900
    %1102 = vmatprep.subr.bf16.mxu0 0
    %1103 = vmatpush1.bf16.msra.mxu0 0
    %1104 = vmatprep.subr.bf16.mxu0 0
    %1105 = vmatpush1.bf16.msra.mxu0 0
    %1106 = vmatprep.subr.bf16.mxu0 0
    %1107 = vmatpush1.bf16.msra.mxu0 0
    %1108 = vmatprep.subr.bf16.mxu0 0
    %1109 = vmatpush1.bf16.msra.mxu0 0
    %1110 = vmatprep.subr.bf16.mxu0 0
    %1111 = vmatpush1.bf16.msra.mxu0 0
    %1112 = vmatprep.subr.bf16.mxu0 0
    %1113 = vmatpush1.bf16.msra.mxu0 0
    %1114 = vmatprep.subr.bf16.mxu0 0
    %1115 = vmatpush1.bf16.msra.mxu0 0
    %1116 = vmatprep.subr.bf16.mxu0 0
    %1117 = vmatpush1.bf16.msra.mxu0 0
    %1118 = vmatprep.subr.bf16.mxu0 0
    %1119 = vmatpush1.bf16.msra.mxu0 0
    %1120 = vmatprep.subr.bf16.mxu0 0
    %1121 = vmatpush1.bf16.msra.mxu0 0
    %1122 = vmatprep.subr.bf16.mxu0 0
    %1123 = vmatpush1.bf16.msra.mxu0 0
    %1124 = vmatprep.subr.bf16.mxu0 0
    %1125 = vmatpush1.bf16.msra.mxu0 0
    %1126 = vmatprep.subr.bf16.mxu0 0
    %1127 = vmatpush1.bf16.msra.mxu0 0
    %1128 = vmatprep.subr.bf16.mxu0 0
    %1129 = vmatpush1.bf16.msra.mxu0 0
    %1130 = vmatprep.mubr.bf16.mxu0 0
    %1131 = vmatmul.mubr.bf16.gmra.mrb[0].mxu0 %v1096
    %v1132 = vpop.f32.mrb[0].mxu0
    %v1133 = vadd.f32 0.0, %v1132
    %v1134 = vpop.f32.mrb[0].mxu0
    %v1135 = vpop.f32.mrb[0].mxu0
    %v1136 = vpop.f32.mrb[0].mxu0
    %1137 = vdwg.mxu0
    %v1138 = vadd.f32 %v882, %v1133
    %v1139 = vxor.u32 %v1138, 2147483648
    %v1140 = vmul.f32 %v1139, 1.442695
    %v1141 = vpow.pop %v1140
    %v1142 = vadd.f32 %v1141, 1.0
    %v1143 = vrcp.pop %v1142
    %v1144 = vmul.f32 1.0, %v1143
    %v1145 = vtanh.pop %v1138
    %v1146 = vmul.f32 %v1144, %v1060
    %1148 = vrot.lane.b32.xlu0 %v1145, 32
    %v1149 = vpop.permute.xlu0 %1148
    %v1151 = vmul.f32 %v1144, %v1149
    %1153 = vrot.lane.b32.xlu0 %v1151, 32
    %v1154 = vpop.permute.xlu0 %1153
    %v1156 = vadd.f32 %v1146, %v1154
    %v1157 = vtanh.pop %v1156
    %1159 = vrot.lane.b32.xlu0 %v1157, 32
    %v1160 = vpop.permute.xlu0 %1159
    %v1162 = vmul.f32 %v1144, %v1160
    %v1163 = vpack.c.bf16 %v1162, %v1162
    %v1166 = vunpack.c.l.s4 1966171168
    %v1167 = vunpack.c.0.s8 %v1166
    %v1168 = vlaneseq
    %v1169 = vshrl.u32 %v1168, 7
    %v1170 = vsub.s32 %v1167, %v1169
    %v1171 = vrot.slane %v1163, %v1170
    %v1173 = vunpack.c.l.s4 1966171168
    %v1174 = vunpack.c.0.s8 %v1173
    %v1175 = vlaneseq
    %v1176 = vshrl.u32 %v1175, 7
    %v1177 = vsub.s32 %v1174, %v1176
    %v1178 = vrot.slane %v1171, %v1177
    %1179 = vrot.lane.b32.xlu0 %v1178, 64
    %v1180 = vpop.permute.xlu0 %1179
    %s1182 = scalar_lea.vmem [#allocation3], 2
    %1183 = vst.msk [vmem:[%s1182] sm:$0x1] %vm990, %v1180
    %1184 = vrot.lane.b32.xlu0 %v1178, 48
    %v1185 = vpop.permute.xlu0 %1184
    %s1187 = scalar_lea.vmem [#allocation3], 13
    %1188 = vst.msk [vmem:[%s1187] sm:$0x1] %vm990, %v1185
    %1189 = vrot.lane.b32.xlu0 %v1163, 64
    %v1190 = vpop.permute.xlu0 %1189
    %v1192 = vsel %vm903, %v1190, 0
    %1194 = vmatprep.subr.bf16.mxu0 0
    %1195 = vmatpush1.bf16.msra.mxu0 %v899
    %1196 = vmatprep.subr.bf16.mxu0 0
    %1197 = vmatpush1.bf16.msra.mxu0 %v900
    %1198 = vmatprep.subr.bf16.mxu0 0
    %1199 = vmatpush1.bf16.msra.mxu0 0
    %1200 = vmatprep.subr.bf16.mxu0 0
    %1201 = vmatpush1.bf16.msra.mxu0 0
    %1202 = vmatprep.subr.bf16.mxu0 0
    %1203 = vmatpush1.bf16.msra.mxu0 0
    %1204 = vmatprep.subr.bf16.mxu0 0
    %1205 = vmatpush1.bf16.msra.mxu0 0
    %1206 = vmatprep.subr.bf16.mxu0 0
    %1207 = vmatpush1.bf16.msra.mxu0 0
    %1208 = vmatprep.subr.bf16.mxu0 0
    %1209 = vmatpush1.bf16.msra.mxu0 0
    %1210 = vmatprep.subr.bf16.mxu0 0
    %1211 = vmatpush1.bf16.msra.mxu0 0
    %1212 = vmatprep.subr.bf16.mxu0 0
    %1213 = vmatpush1.bf16.msra.mxu0 0
    %1214 = vmatprep.subr.bf16.mxu0 0
    %1215 = vmatpush1.bf16.msra.mxu0 0
    %1216 = vmatprep.subr.bf16.mxu0 0
    %1217 = vmatpush1.bf16.msra.mxu0 0
    %1218 = vmatprep.subr.bf16.mxu0 0
    %1219 = vmatpush1.bf16.msra.mxu0 0
    %1220 = vmatprep.subr.bf16.mxu0 0
    %1221 = vmatpush1.bf16.msra.mxu0 0
    %1222 = vmatprep.subr.bf16.mxu0 0
    %1223 = vmatpush1.bf16.msra.mxu0 0
    %1224 = vmatprep.subr.bf16.mxu0 0
    %1225 = vmatpush1.bf16.msra.mxu0 0
    %1226 = vmatprep.mubr.bf16.mxu0 0
    %1227 = vmatmul.mubr.bf16.gmra.mrb[0].mxu0 %v1192
    %v1228 = vpop.f32.mrb[0].mxu0
    %v1229 = vadd.f32 0.0, %v1228
    %v1230 = vpop.f32.mrb[0].mxu0
    %v1231 = vpop.f32.mrb[0].mxu0
    %v1232 = vpop.f32.mrb[0].mxu0
    %1233 = vdwg.mxu0
    %v1234 = vadd.f32 %v882, %v1229
    %v1235 = vxor.u32 %v1234, 2147483648
    %v1236 = vmul.f32 %v1235, 1.442695
    %v1237 = vpow.pop %v1236
    %v1238 = vadd.f32 %v1237, 1.0
    %v1239 = vrcp.pop %v1238
    %v1240 = vmul.f32 1.0, %v1239
    %v1241 = vtanh.pop %v1234
    %v1242 = vmul.f32 %v1240, %v1156
    %1244 = vrot.lane.b32.xlu0 %v1241, 32
    %v1245 = vpop.permute.xlu0 %1244
    %v1247 = vmul.f32 %v1240, %v1245
    %1249 = vrot.lane.b32.xlu0 %v1247, 32
    %v1250 = vpop.permute.xlu0 %1249
    %v1252 = vadd.f32 %v1242, %v1250
    %v1253 = vtanh.pop %v1252
    %1255 = vrot.lane.b32.xlu0 %v1253, 32
    %v1256 = vpop.permute.xlu0 %1255
    %v1258 = vmul.f32 %v1240, %v1256
    %v1259 = vpack.c.bf16 %v1258, %v1258
    %v1262 = vunpack.c.l.s4 1966171168
    %v1263 = vunpack.c.0.s8 %v1262
    %v1264 = vlaneseq
    %v1265 = vshrl.u32 %v1264, 7
    %v1266 = vsub.s32 %v1263, %v1265
    %v1267 = vrot.slane %v1259, %v1266
    %v1269 = vunpack.c.l.s4 1966171168
    %v1270 = vunpack.c.0.s8 %v1269
    %v1271 = vlaneseq
    %v1272 = vshrl.u32 %v1271, 7
    %v1273 = vsub.s32 %v1270, %v1272
    %v1274 = vrot.slane %v1267, %v1273
    %1275 = vrot.lane.b32.xlu0 %v1274, 64
    %v1276 = vpop.permute.xlu0 %1275
    %s1278 = scalar_lea.vmem [#allocation3], 3
    %1279 = vst.msk [vmem:[%s1278] sm:$0x1] %vm990, %v1276
    %1280 = vrot.lane.b32.xlu0 %v1274, 48
    %v1281 = vpop.permute.xlu0 %1280
    %s1283 = scalar_lea.vmem [#allocation3], 12
    %1284 = vst.msk [vmem:[%s1283] sm:$0x1] %vm990, %v1281
    %1285 = vrot.lane.b32.xlu0 %v1259, 64
    %v1286 = vpop.permute.xlu0 %1285
    %v1288 = vsel %vm903, %v1286, 0
    %1290 = vmatprep.subr.bf16.mxu0 0
    %1291 = vmatpush1.bf16.msra.mxu0 %v899
    %1292 = vmatprep.subr.bf16.mxu0 0
    %1293 = vmatpush1.bf16.msra.mxu0 %v900
    %1294 = vmatprep.subr.bf16.mxu0 0
    %1295 = vmatpush1.bf16.msra.mxu0 0
    %1296 = vmatprep.subr.bf16.mxu0 0
    %1297 = vmatpush1.bf16.msra.mxu0 0
    %1298 = vmatprep.subr.bf16.mxu0 0
    %1299 = vmatpush1.bf16.msra.mxu0 0
    %1300 = vmatprep.subr.bf16.mxu0 0
    %1301 = vmatpush1.bf16.msra.mxu0 0
    %1302 = vmatprep.subr.bf16.mxu0 0
    %1303 = vmatpush1.bf16.msra.mxu0 0
    %1304 = vmatprep.subr.bf16.mxu0 0
    %1305 = vmatpush1.bf16.msra.mxu0 0
    %1306 = vmatprep.subr.bf16.mxu0 0
    %1307 = vmatpush1.bf16.msra.mxu0 0
    %1308 = vmatprep.subr.bf16.mxu0 0
    %1309 = vmatpush1.bf16.msra.mxu0 0
    %1310 = vmatprep.subr.bf16.mxu0 0
    %1311 = vmatpush1.bf16.msra.mxu0 0
    %1312 = vmatprep.subr.bf16.mxu0 0
    %1313 = vmatpush1.bf16.msra.mxu0 0
    %1314 = vmatprep.subr.bf16.mxu0 0
    %1315 = vmatpush1.bf16.msra.mxu0 0
    %1316 = vmatprep.subr.bf16.mxu0 0
    %1317 = vmatpush1.bf16.msra.mxu0 0
    %1318 = vmatprep.subr.bf16.mxu0 0
    %1319 = vmatpush1.bf16.msra.mxu0 0
    %1320 = vmatprep.subr.bf16.mxu0 0
    %1321 = vmatpush1.bf16.msra.mxu0 0
    %1322 = vmatprep.mubr.bf16.mxu0 0
    %1323 = vmatmul.mubr.bf16.gmra.mrb[0].mxu0 %v1288
    %v1324 = vpop.f32.mrb[0].mxu0
    %v1325 = vadd.f32 0.0, %v1324
    %v1326 = vpop.f32.mrb[0].mxu0
    %v1327 = vpop.f32.mrb[0].mxu0
    %v1328 = vpop.f32.mrb[0].mxu0
    %1329 = vdwg.mxu0
    %v1330 = vadd.f32 %v882, %v1325
    %v1331 = vxor.u32 %v1330, 2147483648
    %v1332 = vmul.f32 %v1331, 1.442695
    %v1333 = vpow.pop %v1332
    %v1334 = vadd.f32 %v1333, 1.0
    %v1335 = vrcp.pop %v1334
    %v1336 = vmul.f32 1.0, %v1335
    %v1337 = vtanh.pop %v1330
    %v1338 = vmul.f32 %v1336, %v1252
    %1340 = vrot.lane.b32.xlu0 %v1337, 32
    %v1341 = vpop.permute.xlu0 %1340
    %v1343 = vmul.f32 %v1336, %v1341
    %1345 = vrot.lane.b32.xlu0 %v1343, 32
    %v1346 = vpop.permute.xlu0 %1345
    %v1348 = vadd.f32 %v1338, %v1346
    %v1349 = vtanh.pop %v1348
    %1351 = vrot.lane.b32.xlu0 %v1349, 32
    %v1352 = vpop.permute.xlu0 %1351
    %v1354 = vmul.f32 %v1336, %v1352
    %v1355 = vpack.c.bf16 %v1354, %v1354
    %v1358 = vunpack.c.l.s4 1966171168
    %v1359 = vunpack.c.0.s8 %v1358
    %v1360 = vlaneseq
    %v1361 = vshrl.u32 %v1360, 7
    %v1362 = vsub.s32 %v1359, %v1361
    %v1363 = vrot.slane %v1355, %v1362
    %v1365 = vunpack.c.l.s4 1966171168
    %v1366 = vunpack.c.0.s8 %v1365
    %v1367 = vlaneseq
    %v1368 = vshrl.u32 %v1367, 7
    %v1369 = vsub.s32 %v1366, %v1368
    %v1370 = vrot.slane %v1363, %v1369
    %1371 = vrot.lane.b32.xlu0 %v1370, 64
    %v1372 = vpop.permute.xlu0 %1371
    %s1374 = scalar_lea.vmem [#allocation3], 4
    %1375 = vst.msk [vmem:[%s1374] sm:$0x1] %vm990, %v1372
    %1376 = vrot.lane.b32.xlu0 %v1370, 48
    %v1377 = vpop.permute.xlu0 %1376
    %s1379 = scalar_lea.vmem [#allocation3], 11
    %1380 = vst.msk [vmem:[%s1379] sm:$0x1] %vm990, %v1377
    %1381 = vrot.lane.b32.xlu0 %v1355, 64
    %v1382 = vpop.permute.xlu0 %1381
    %v1384 = vsel %vm903, %v1382, 0
    %1386 = vmatprep.subr.bf16.mxu0 0
    %1387 = vmatpush1.bf16.msra.mxu0 %v899
    %1388 = vmatprep.subr.bf16.mxu0 0
    %1389 = vmatpush1.bf16.msra.mxu0 %v900
    %1390 = vmatprep.subr.bf16.mxu0 0
    %1391 = vmatpush1.bf16.msra.mxu0 0
    %1392 = vmatprep.subr.bf16.mxu0 0
    %1393 = vmatpush1.bf16.msra.mxu0 0
    %1394 = vmatprep.subr.bf16.mxu0 0
    %1395 = vmatpush1.bf16.msra.mxu0 0
    %1396 = vmatprep.subr.bf16.mxu0 0
    %1397 = vmatpush1.bf16.msra.mxu0 0
    %1398 = vmatprep.subr.bf16.mxu0 0
    %1399 = vmatpush1.bf16.msra.mxu0 0
    %1400 = vmatprep.subr.bf16.mxu0 0
    %1401 = vmatpush1.bf16.msra.mxu0 0
    %1402 = vmatprep.subr.bf16.mxu0 0
    %1403 = vmatpush1.bf16.msra.mxu0 0
    %1404 = vmatprep.subr.bf16.mxu0 0
    %1405 = vmatpush1.bf16.msra.mxu0 0
    %1406 = vmatprep.subr.bf16.mxu0 0
    %1407 = vmatpush1.bf16.msra.mxu0 0
    %1408 = vmatprep.subr.bf16.mxu0 0
    %1409 = vmatpush1.bf16.msra.mxu0 0
    %1410 = vmatprep.subr.bf16.mxu0 0
    %1411 = vmatpush1.bf16.msra.mxu0 0
    %1412 = vmatprep.subr.bf16.mxu0 0
    %1413 = vmatpush1.bf16.msra.mxu0 0
    %1414 = vmatprep.subr.bf16.mxu0 0
    %1415 = vmatpush1.bf16.msra.mxu0 0
    %1416 = vmatprep.subr.bf16.mxu0 0
    %1417 = vmatpush1.bf16.msra.mxu0 0
    %1418 = vmatprep.mubr.bf16.mxu0 0
    %1419 = vmatmul.mubr.bf16.gmra.mrb[0].mxu0 %v1384
    %v1420 = vpop.f32.mrb[0].mxu0
    %v1421 = vadd.f32 0.0, %v1420
    %v1422 = vpop.f32.mrb[0].mxu0
    %v1423 = vpop.f32.mrb[0].mxu0
    %v1424 = vpop.f32.mrb[0].mxu0
    %1425 = vdwg.mxu0
    %v1426 = vadd.f32 %v882, %v1421
    %v1427 = vxor.u32 %v1426, 2147483648
    %v1428 = vmul.f32 %v1427, 1.442695
    %v1429 = vpow.pop %v1428
    %v1430 = vadd.f32 %v1429, 1.0
    %v1431 = vrcp.pop %v1430
    %v1432 = vmul.f32 1.0, %v1431
    %v1433 = vtanh.pop %v1426
    %v1434 = vmul.f32 %v1432, %v1348
    %1436 = vrot.lane.b32.xlu0 %v1433, 32
    %v1437 = vpop.permute.xlu0 %1436
    %v1439 = vmul.f32 %v1432, %v1437
    %1441 = vrot.lane.b32.xlu0 %v1439, 32
    %v1442 = vpop.permute.xlu0 %1441
    %v1444 = vadd.f32 %v1434, %v1442
    %v1445 = vtanh.pop %v1444
    %1447 = vrot.lane.b32.xlu0 %v1445, 32
    %v1448 = vpop.permute.xlu0 %1447
    %v1450 = vmul.f32 %v1432, %v1448
    %v1451 = vpack.c.bf16 %v1450, %v1450
    %v1454 = vunpack.c.l.s4 1966171168
    %v1455 = vunpack.c.0.s8 %v1454
    %v1456 = vlaneseq
    %v1457 = vshrl.u32 %v1456, 7
    %v1458 = vsub.s32 %v1455, %v1457
    %v1459 = vrot.slane %v1451, %v1458
    %v1461 = vunpack.c.l.s4 1966171168
    %v1462 = vunpack.c.0.s8 %v1461
    %v1463 = vlaneseq
    %v1464 = vshrl.u32 %v1463, 7
    %v1465 = vsub.s32 %v1462, %v1464
    %v1466 = vrot.slane %v1459, %v1465
    %1467 = vrot.lane.b32.xlu0 %v1466, 64
    %v1468 = vpop.permute.xlu0 %1467
    %s1470 = scalar_lea.vmem [#allocation3], 5
    %1471 = vst.msk [vmem:[%s1470] sm:$0x1] %vm990, %v1468
    %1472 = vrot.lane.b32.xlu0 %v1466, 48
    %v1473 = vpop.permute.xlu0 %1472
    %s1475 = scalar_lea.vmem [#allocation3], 10
    %1476 = vst.msk [vmem:[%s1475] sm:$0x1] %vm990, %v1473
    %1477 = vrot.lane.b32.xlu0 %v1451, 64
    %v1478 = vpop.permute.xlu0 %1477
    %v1480 = vsel %vm903, %v1478, 0
    %1482 = vmatprep.subr.bf16.mxu0 0
    %1483 = vmatpush1.bf16.msra.mxu0 %v899
    %1484 = vmatprep.subr.bf16.mxu0 0
    %1485 = vmatpush1.bf16.msra.mxu0 %v900
    %1486 = vmatprep.subr.bf16.mxu0 0
    %1487 = vmatpush1.bf16.msra.mxu0 0
    %1488 = vmatprep.subr.bf16.mxu0 0
    %1489 = vmatpush1.bf16.msra.mxu0 0
    %1490 = vmatprep.subr.bf16.mxu0 0
    %1491 = vmatpush1.bf16.msra.mxu0 0
    %1492 = vmatprep.subr.bf16.mxu0 0
    %1493 = vmatpush1.bf16.msra.mxu0 0
    %1494 = vmatprep.subr.bf16.mxu0 0
    %1495 = vmatpush1.bf16.msra.mxu0 0
    %1496 = vmatprep.subr.bf16.mxu0 0
    %1497 = vmatpush1.bf16.msra.mxu0 0
    %1498 = vmatprep.subr.bf16.mxu0 0
    %1499 = vmatpush1.bf16.msra.mxu0 0
    %1500 = vmatprep.subr.bf16.mxu0 0
    %1501 = vmatpush1.bf16.msra.mxu0 0
    %1502 = vmatprep.subr.bf16.mxu0 0
    %1503 = vmatpush1.bf16.msra.mxu0 0
    %1504 = vmatprep.subr.bf16.mxu0 0
    %1505 = vmatpush1.bf16.msra.mxu0 0
    %1506 = vmatprep.subr.bf16.mxu0 0
    %1507 = vmatpush1.bf16.msra.mxu0 0
    %1508 = vmatprep.subr.bf16.mxu0 0
    %1509 = vmatpush1.bf16.msra.mxu0 0
    %1510 = vmatprep.subr.bf16.mxu0 0
    %1511 = vmatpush1.bf16.msra.mxu0 0
    %1512 = vmatprep.subr.bf16.mxu0 0
    %1513 = vmatpush1.bf16.msra.mxu0 0
    %1514 = vmatprep.mubr.bf16.mxu0 0
    %1515 = vmatmul.mubr.bf16.gmra.mrb[0].mxu0 %v1480
    %v1516 = vpop.f32.mrb[0].mxu0
    %v1517 = vadd.f32 0.0, %v1516
    %v1518 = vpop.f32.mrb[0].mxu0
    %v1519 = vpop.f32.mrb[0].mxu0
    %v1520 = vpop.f32.mrb[0].mxu0
    %1521 = vdwg.mxu0
    %v1522 = vadd.f32 %v882, %v1517
    %v1523 = vxor.u32 %v1522, 2147483648
    %v1524 = vmul.f32 %v1523, 1.442695
    %v1525 = vpow.pop %v1524
    %v1526 = vadd.f32 %v1525, 1.0
    %v1527 = vrcp.pop %v1526
    %v1528 = vmul.f32 1.0, %v1527
    %v1529 = vtanh.pop %v1522
    %v1530 = vmul.f32 %v1528, %v1444
    %1532 = vrot.lane.b32.xlu0 %v1529, 32
    %v1533 = vpop.permute.xlu0 %1532
    %v1535 = vmul.f32 %v1528, %v1533
    %1537 = vrot.lane.b32.xlu0 %v1535, 32
    %v1538 = vpop.permute.xlu0 %1537
    %v1540 = vadd.f32 %v1530, %v1538
    %v1541 = vtanh.pop %v1540
    %1543 = vrot.lane.b32.xlu0 %v1541, 32
    %v1544 = vpop.permute.xlu0 %1543
    %v1546 = vmul.f32 %v1528, %v1544
    %v1547 = vpack.c.bf16 %v1546, %v1546
    %v1550 = vunpack.c.l.s4 1966171168
    %v1551 = vunpack.c.0.s8 %v1550
    %v1552 = vlaneseq
    %v1553 = vshrl.u32 %v1552, 7
    %v1554 = vsub.s32 %v1551, %v1553
    %v1555 = vrot.slane %v1547, %v1554
    %v1557 = vunpack.c.l.s4 1966171168
    %v1558 = vunpack.c.0.s8 %v1557
    %v1559 = vlaneseq
    %v1560 = vshrl.u32 %v1559, 7
    %v1561 = vsub.s32 %v1558, %v1560
    %v1562 = vrot.slane %v1555, %v1561
    %1563 = vrot.lane.b32.xlu0 %v1562, 64
    %v1564 = vpop.permute.xlu0 %1563
    %s1566 = scalar_lea.vmem [#allocation3], 6
    %1567 = vst.msk [vmem:[%s1566] sm:$0x1] %vm990, %v1564
    %1568 = vrot.lane.b32.xlu0 %v1562, 48
    %v1569 = vpop.permute.xlu0 %1568
    %s1571 = scalar_lea.vmem [#allocation3], 9
    %1572 = vst.msk [vmem:[%s1571] sm:$0x1] %vm990, %v1569
    %1573 = vrot.lane.b32.xlu0 %v1547, 64
    %v1574 = vpop.permute.xlu0 %1573
    %v1576 = vsel %vm903, %v1574, 0
    %1578 = vmatprep.subr.bf16.mxu0 0
    %1579 = vmatpush1.bf16.msra.mxu0 %v899
    %1580 = vmatprep.subr.bf16.mxu0 0
    %1581 = vmatpush1.bf16.msra.mxu0 %v900
    %1582 = vmatprep.subr.bf16.mxu0 0
    %1583 = vmatpush1.bf16.msra.mxu0 0
    %1584 = vmatprep.subr.bf16.mxu0 0
    %1585 = vmatpush1.bf16.msra.mxu0 0
    %1586 = vmatprep.subr.bf16.mxu0 0
    %1587 = vmatpush1.bf16.msra.mxu0 0
    %1588 = vmatprep.subr.bf16.mxu0 0
    %1589 = vmatpush1.bf16.msra.mxu0 0
    %1590 = vmatprep.subr.bf16.mxu0 0
    %1591 = vmatpush1.bf16.msra.mxu0 0
    %1592 = vmatprep.subr.bf16.mxu0 0
    %1593 = vmatpush1.bf16.msra.mxu0 0
    %1594 = vmatprep.subr.bf16.mxu0 0
    %1595 = vmatpush1.bf16.msra.mxu0 0
    %1596 = vmatprep.subr.bf16.mxu0 0
    %1597 = vmatpush1.bf16.msra.mxu0 0
    %1598 = vmatprep.subr.bf16.mxu0 0
    %1599 = vmatpush1.bf16.msra.mxu0 0
    %1600 = vmatprep.subr.bf16.mxu0 0
    %1601 = vmatpush1.bf16.msra.mxu0 0
    %1602 = vmatprep.subr.bf16.mxu0 0
    %1603 = vmatpush1.bf16.msra.mxu0 0
    %1604 = vmatprep.subr.bf16.mxu0 0
    %1605 = vmatpush1.bf16.msra.mxu0 0
    %1606 = vmatprep.subr.bf16.mxu0 0
    %1607 = vmatpush1.bf16.msra.mxu0 0
    %1608 = vmatprep.subr.bf16.mxu0 0
    %1609 = vmatpush1.bf16.msra.mxu0 0
    %1610 = vmatprep.mubr.bf16.mxu0 0
    %1611 = vmatmul.mubr.bf16.gmra.mrb[0].mxu0 %v1576
    %v1612 = vpop.f32.mrb[0].mxu0
    %v1613 = vadd.f32 0.0, %v1612
    %v1614 = vpop.f32.mrb[0].mxu0
    %v1615 = vpop.f32.mrb[0].mxu0
    %v1616 = vpop.f32.mrb[0].mxu0
    %1617 = vdwg.mxu0
    %v1618 = vadd.f32 %v882, %v1613
    %v1619 = vxor.u32 %v1618, 2147483648
    %v1620 = vmul.f32 %v1619, 1.442695
    %v1621 = vpow.pop %v1620
    %v1622 = vadd.f32 %v1621, 1.0
    %v1623 = vrcp.pop %v1622
    %v1624 = vmul.f32 1.0, %v1623
    %v1625 = vtanh.pop %v1618
    %v1626 = vmul.f32 %v1624, %v1540
    %1628 = vrot.lane.b32.xlu0 %v1625, 32
    %v1629 = vpop.permute.xlu0 %1628
    %v1631 = vmul.f32 %v1624, %v1629
    %1633 = vrot.lane.b32.xlu0 %v1631, 32
    %v1634 = vpop.permute.xlu0 %1633
    %v1636 = vadd.f32 %v1626, %v1634
    %v1637 = vtanh.pop %v1636
    %1639 = vrot.lane.b32.xlu0 %v1637, 32
    %v1640 = vpop.permute.xlu0 %1639
    %v1642 = vmul.f32 %v1624, %v1640
    %v1643 = vpack.c.bf16 %v1642, %v1642
    %v1646 = vunpack.c.l.s4 1966171168
    %v1647 = vunpack.c.0.s8 %v1646
    %v1648 = vlaneseq
    %v1649 = vshrl.u32 %v1648, 7
    %v1650 = vsub.s32 %v1647, %v1649
    %v1651 = vrot.slane %v1643, %v1650
    %v1653 = vunpack.c.l.s4 1966171168
    %v1654 = vunpack.c.0.s8 %v1653
    %v1655 = vlaneseq
    %v1656 = vshrl.u32 %v1655, 7
    %v1657 = vsub.s32 %v1654, %v1656
    %v1658 = vrot.slane %v1651, %v1657
    %1659 = vrot.lane.b32.xlu0 %v1658, 64
    %v1660 = vpop.permute.xlu0 %1659
    %s1662 = scalar_lea.vmem [#allocation3], 7
    %1663 = vst.msk [vmem:[%s1662] sm:$0x1] %vm990, %v1660
    %1664 = vrot.lane.b32.xlu0 %v1658, 48
    %v1665 = vpop.permute.xlu0 %1664
    %s1667 = scalar_lea.vmem [#allocation3], 8
    %1668 = vst.msk [vmem:[%s1667] sm:$0x1] %vm990, %v1665
    %v1669 = vld [vmem:[#allocation3] sm:$0x1]
    %v1670 = vld [vmem:[#allocation3 + $0x1] sm:$0x1]
    %v1671 = vld [vmem:[#allocation3 + $0x2] sm:$0x1]
    %v1672 = vld [vmem:[#allocation3 + $0x3] sm:$0x1]
    %v1673 = vld [vmem:[#allocation3 + $0x4] sm:$0x1]
    %v1674 = vld [vmem:[#allocation3 + $0x5] sm:$0x1]
    %v1675 = vld [vmem:[#allocation3 + $0x6] sm:$0x1]
    %v1676 = vld [vmem:[#allocation3 + $0x7] sm:$0x1]
    %v1677 = vld [vmem:[%s1667] sm:$0x1]
    %v1678 = vld [vmem:[%s1667 + $0x1] sm:$0x1]
    %v1679 = vld [vmem:[%s1667 + $0x2] sm:$0x1]
    %v1680 = vld [vmem:[%s1667 + $0x3] sm:$0x1]
    %v1681 = vld [vmem:[%s1667 + $0x4] sm:$0x1]
    %v1682 = vld [vmem:[%s1667 + $0x5] sm:$0x1]
    %v1683 = vld [vmem:[%s1667 + $0x6] sm:$0x1]
    %v1684 = vld [vmem:[%s1667 + $0x7] sm:$0x1]
    %v1685 = vld [vmem:[%s7] sm:$0xf]
    %v1686 = vld [vmem:[%s7 + $0x4] sm:$0xf]
    %v1687 = vld [vmem:[%s8] sm:$0xf]
    %v1688 = vld [vmem:[%s8 + $0x4] sm:$0xf]
    %v1697 = vcombine.low %v1677, %v1678
    %v1698 = vcombine.low %v1679, %v1680
    %v1699 = vcombine.low %v1681, %v1682
    %v1700 = vcombine.low %v1683, %v1684
    %v1702 = vunpack.c.l.s4 1966171168
    %v1703 = vunpack.c.0.s8 %v1702
    %v1704 = vlaneseq
    %v1705 = vshrl.u32 %v1704, 7
    %v1706 = vsub.s32 %v1703, %v1705
    %v1707 = vrot.slane %v1697, %v1706
    %v1709 = vunpack.c.l.s4 1966171168
    %v1710 = vunpack.c.0.s8 %v1709
    %v1711 = vlaneseq
    %v1712 = vshrl.u32 %v1711, 7
    %v1713 = vsub.s32 %v1710, %v1712
    %v1714 = vrot.slane %v1698, %v1713
    %v1716 = vunpack.c.l.s4 1966171168
    %v1717 = vunpack.c.0.s8 %v1716
    %v1718 = vlaneseq
    %v1719 = vshrl.u32 %v1718, 7
    %v1720 = vsub.s32 %v1717, %v1719
    %v1721 = vrot.slane %v1699, %v1720
    %v1723 = vunpack.c.l.s4 1966171168
    %v1724 = vunpack.c.0.s8 %v1723
    %v1725 = vlaneseq
    %v1726 = vshrl.u32 %v1725, 7
    %v1727 = vsub.s32 %v1724, %v1726
    %v1728 = vrot.slane %v1700, %v1727
    %v1729 = vcombine.low %v1707, %v1714
    %v1730 = vcombine.low %v1721, %v1728
    %v1732 = vunpack.c.l.s4 1966171168
    %v1733 = vunpack.c.0.s8 %v1732
    %v1734 = vlaneseq
    %v1735 = vshrl.u32 %v1734, 7
    %v1736 = vsub.s32 %v1733, %v1735
    %v1737 = vrot.slane %v1729, %v1736
    %v1739 = vunpack.c.l.s4 1966171168
    %v1740 = vunpack.c.0.s8 %v1739
    %v1741 = vlaneseq
    %v1742 = vshrl.u32 %v1741, 7
    %v1743 = vsub.s32 %v1740, %v1742
    %v1744 = vrot.slane %v1730, %v1743
    %v1745 = vcombine.low %v1737, %v1744
    %v1748 = vunpack.c.l.b16 %v1687
    %v1749 = vunpack.c.l.b16 %v1688
    %v1750 = vpack.c.b16 %v1749, %v1748
    %v1753 = vsel %vm223, %v1745, 0
    %1755 = vmatprep.subr.bf16.mxu0 0
    %1756 = vmatpush1.bf16.msra.mxu0 %v1750
    %1757 = vmatprep.subr.bf16.mxu0 0
    %1758 = vmatpush1.bf16.msra.mxu0 0
    %1759 = vmatprep.subr.bf16.mxu0 0
    %1760 = vmatpush1.bf16.msra.mxu0 0
    %1761 = vmatprep.subr.bf16.mxu0 0
    %1762 = vmatpush1.bf16.msra.mxu0 0
    %1763 = vmatprep.subr.bf16.mxu0 0
    %1764 = vmatpush1.bf16.msra.mxu0 0
    %1765 = vmatprep.subr.bf16.mxu0 0
    %1766 = vmatpush1.bf16.msra.mxu0 0
    %1767 = vmatprep.subr.bf16.mxu0 0
    %1768 = vmatpush1.bf16.msra.mxu0 0
    %1769 = vmatprep.subr.bf16.mxu0 0
    %1770 = vmatpush1.bf16.msra.mxu0 0
    %1771 = vmatprep.subr.bf16.mxu0 0
    %1772 = vmatpush1.bf16.msra.mxu0 0
    %1773 = vmatprep.subr.bf16.mxu0 0
    %1774 = vmatpush1.bf16.msra.mxu0 0
    %1775 = vmatprep.subr.bf16.mxu0 0
    %1776 = vmatpush1.bf16.msra.mxu0 0
    %1777 = vmatprep.subr.bf16.mxu0 0
    %1778 = vmatpush1.bf16.msra.mxu0 0
    %1779 = vmatprep.subr.bf16.mxu0 0
    %1780 = vmatpush1.bf16.msra.mxu0 0
    %1781 = vmatprep.subr.bf16.mxu0 0
    %1782 = vmatpush1.bf16.msra.mxu0 0
    %1783 = vmatprep.subr.bf16.mxu0 0
    %1784 = vmatpush1.bf16.msra.mxu0 0
    %1785 = vmatprep.subr.bf16.mxu0 0
    %1786 = vmatpush1.bf16.msra.mxu0 0
    %1787 = vmatprep.mubr.bf16.mxu0 0
    %1788 = vmatmul.mubr.bf16.gmra.mrb[0].mxu0 %v1753
    %v1789 = vpop.f32.mrb[0].mxu0
    %v1790 = vadd.f32 0.0, %v1789
    %v1791 = vpop.f32.mrb[0].mxu0
    %v1792 = vpop.f32.mrb[0].mxu0
    %v1793 = vadd.f32 0.0, %v1792
    %v1794 = vpop.f32.mrb[0].mxu0
    %1795 = vdwg.mxu0
    %v1804 = vcombine.low %v1669, %v1670
    %v1805 = vcombine.low %v1671, %v1672
    %v1806 = vcombine.low %v1673, %v1674
    %v1807 = vcombine.low %v1675, %v1676
    %v1809 = vunpack.c.l.s4 1966171168
    %v1810 = vunpack.c.0.s8 %v1809
    %v1811 = vlaneseq
    %v1812 = vshrl.u32 %v1811, 7
    %v1813 = vsub.s32 %v1810, %v1812
    %v1814 = vrot.slane %v1804, %v1813
    %v1816 = vunpack.c.l.s4 1966171168
    %v1817 = vunpack.c.0.s8 %v1816
    %v1818 = vlaneseq
    %v1819 = vshrl.u32 %v1818, 7
    %v1820 = vsub.s32 %v1817, %v1819
    %v1821 = vrot.slane %v1805, %v1820
    %v1823 = vunpack.c.l.s4 1966171168
    %v1824 = vunpack.c.0.s8 %v1823
    %v1825 = vlaneseq
    %v1826 = vshrl.u32 %v1825, 7
    %v1827 = vsub.s32 %v1824, %v1826
    %v1828 = vrot.slane %v1806, %v1827
    %v1830 = vunpack.c.l.s4 1966171168
    %v1831 = vunpack.c.0.s8 %v1830
    %v1832 = vlaneseq
    %v1833 = vshrl.u32 %v1832, 7
    %v1834 = vsub.s32 %v1831, %v1833
    %v1835 = vrot.slane %v1807, %v1834
    %v1836 = vcombine.low %v1814, %v1821
    %v1837 = vcombine.low %v1828, %v1835
    %v1839 = vunpack.c.l.s4 1966171168
    %v1840 = vunpack.c.0.s8 %v1839
    %v1841 = vlaneseq
    %v1842 = vshrl.u32 %v1841, 7
    %v1843 = vsub.s32 %v1840, %v1842
    %v1844 = vrot.slane %v1836, %v1843
    %v1846 = vunpack.c.l.s4 1966171168
    %v1847 = vunpack.c.0.s8 %v1846
    %v1848 = vlaneseq
    %v1849 = vshrl.u32 %v1848, 7
    %v1850 = vsub.s32 %v1847, %v1849
    %v1851 = vrot.slane %v1837, %v1850
    %v1852 = vcombine.low %v1844, %v1851
    %v1855 = vunpack.c.l.b16 %v1685
    %v1856 = vunpack.c.l.b16 %v1686
    %v1857 = vpack.c.b16 %v1856, %v1855
    %v1860 = vsel %vm223, %v1852, 0
    %1862 = vmatprep.subr.bf16.mxu0 0
    %1863 = vmatpush1.bf16.msra.mxu0 %v1857
    %1864 = vmatprep.subr.bf16.mxu0 0
    %1865 = vmatpush1.bf16.msra.mxu0 0
    %1866 = vmatprep.subr.bf16.mxu0 0
    %1867 = vmatpush1.bf16.msra.mxu0 0
    %1868 = vmatprep.subr.bf16.mxu0 0
    %1869 = vmatpush1.bf16.msra.mxu0 0
    %1870 = vmatprep.subr.bf16.mxu0 0
    %1871 = vmatpush1.bf16.msra.mxu0 0
    %1872 = vmatprep.subr.bf16.mxu0 0
    %1873 = vmatpush1.bf16.msra.mxu0 0
    %1874 = vmatprep.subr.bf16.mxu0 0
    %1875 = vmatpush1.bf16.msra.mxu0 0
    %1876 = vmatprep.subr.bf16.mxu0 0
    %1877 = vmatpush1.bf16.msra.mxu0 0
    %1878 = vmatprep.subr.bf16.mxu0 0
    %1879 = vmatpush1.bf16.msra.mxu0 0
    %1880 = vmatprep.subr.bf16.mxu0 0
    %1881 = vmatpush1.bf16.msra.mxu0 0
    %1882 = vmatprep.subr.bf16.mxu0 0
    %1883 = vmatpush1.bf16.msra.mxu0 0
    %1884 = vmatprep.subr.bf16.mxu0 0
    %1885 = vmatpush1.bf16.msra.mxu0 0
    %1886 = vmatprep.subr.bf16.mxu0 0
    %1887 = vmatpush1.bf16.msra.mxu0 0
    %1888 = vmatprep.subr.bf16.mxu0 0
    %1889 = vmatpush1.bf16.msra.mxu0 0
    %1890 = vmatprep.subr.bf16.mxu0 0
    %1891 = vmatpush1.bf16.msra.mxu0 0
    %1892 = vmatprep.subr.bf16.mxu0 0
    %1893 = vmatpush1.bf16.msra.mxu0 0
    %1894 = vmatprep.mubr.bf16.mxu0 0
    %1895 = vmatmul.mubr.bf16.gmra.mrb[0].mxu0 %v1860
    %v1896 = vpop.f32.mrb[0].mxu0
    %v1897 = vadd.f32 %v1790, %v1896
    %v1898 = vpop.f32.mrb[0].mxu0
    %v1899 = vpop.f32.mrb[0].mxu0
    %v1900 = vadd.f32 %v1793, %v1899
    %v1901 = vpop.f32.mrb[0].mxu0
    %1902 = vdwg.mxu0
    %v1903 = vld [vmem:[%s9] sm:$0x1]
    %v1905 = vlaneseq
    %v1906 = vshrl.u32 %v1905, 7
    %v1907 = vsub.s32 0, %v1906
    %v1908 = vrot.slane %v1903, %v1907
    %v1910 = vadd.f32 %v1897, %v1908
    %v1911 = vadd.f32 %v1900, %v1908
    %v1914 = vcombine.high %v1910, %v1910
    %v1916 = vunpack.c.l.s4 1983009808
    %v1917 = vunpack.c.0.s8 %v1916
    %v1918 = vlaneseq
    %v1919 = vshrl.u32 %v1918, 7
    %v1920 = vsub.s32 %v1917, %v1919
    %v1921 = vrot.slane %v1910, %v1920
    %v1923 = vunpack.c.l.s4 1983009808
    %v1924 = vunpack.c.0.s8 %v1923
    %v1925 = vlaneseq
    %v1926 = vshrl.u32 %v1925, 7
    %v1927 = vsub.s32 %v1924, %v1926
    %v1928 = vrot.slane %v1914, %v1927
    %v1929 = vcombine.high %v1921, %v1921
    %v1930 = vcombine.high %v1928, %v1928
    %v1931 = vcombine.high %v1911, %v1911
    %v1933 = vunpack.c.l.s4 1983009808
    %v1934 = vunpack.c.0.s8 %v1933
    %v1935 = vlaneseq
    %v1936 = vshrl.u32 %v1935, 7
    %v1937 = vsub.s32 %v1934, %v1936
    %v1938 = vrot.slane %v1911, %v1937
    %v1940 = vunpack.c.l.s4 1983009808
    %v1941 = vunpack.c.0.s8 %v1940
    %v1942 = vlaneseq
    %v1943 = vshrl.u32 %v1942, 7
    %v1944 = vsub.s32 %v1941, %v1943
    %v1945 = vrot.slane %v1931, %v1944
    %v1946 = vcombine.high %v1938, %v1938
    %v1947 = vcombine.high %v1945, %v1945
    %vm1956 = vcmask 25600
    %1957 = vst.msk [vmem:[%s11] sm:$0x3] %vm1956, %v1921
    %1958 = vst.msk [vmem:[%s11 + $0x2] sm:$0x3] %vm1956, %v1929
    %1959 = vst.msk [vmem:[%s11 + $0x4] sm:$0x3] %vm1956, %v1928
    %1960 = vst.msk [vmem:[%s11 + $0x6] sm:$0x3] %vm1956, %v1930
    %1961 = vst.msk [vmem:[%s11 + $0x8] sm:$0x3] %vm1956, %v1938
    %1962 = vst.msk [vmem:[%s11 + $0xa] sm:$0x3] %vm1956, %v1946
    %1963 = vst.msk [vmem:[%s11 + $0xc] sm:$0x3] %vm1956, %v1945
    %1964 = vst.msk [vmem:[%s11 + $0xe] sm:$0x3] %vm1956, %v1947
    // Predicated region
    $region42: #{lstm_ae_forward.1} parent=1 // pred_check
      _
    $region43: #{lstm_ae_forward.1} parent=1 // pred_check_branch
      %1966 = sbr.rel (0) target = $region45
    $region44: #{lstm_ae_forward.1} parent=1 // pred_region
      %s1968 = ssub.s32 32, 32
      %1969 = vsyncadd [#allocation5], %s1968
      %s1971 = sshll.u32 [#allocation4], 4
      %s1972 = int_to_ptr.vmem [resolvable:$true] %s1971
      %1974 = dma.vmem_to_hbm [thread:$0]  %s1972, 32, %s10, [#allocation5]
    $region45: #{lstm_ae_forward.1} parent=1 // pred_fallthru
      _
    // Predicated region
    $region46: #{lstm_ae_forward.1} parent=1 // pred_check
      _
    $region47: #{lstm_ae_forward.1} parent=1 // pred_check_branch
      %1976 = sbr.rel (0) target = $region49
    $region48: #{lstm_ae_forward.1} parent=1 // pred_region
      _
    $region49: #{lstm_ae_forward.1} parent=1 // pred_fallthru
      _
    // Predicated region
    $region50: #{lstm_ae_forward.1} parent=1 // pred_check
      _
    $region51: #{lstm_ae_forward.1} parent=1 // pred_check_branch
      %1978 = sbr.rel (0) target = $region53
    $region52: #{lstm_ae_forward.1} parent=1 // pred_region
      %1979 = dma.done [#allocation5], 32
    $region53: #{lstm_ae_forward.1} parent=1 // pred_fallthru
      _
    // Predicated region
    $region54: #{lstm_ae_forward.1} parent=1 // pred_check
      _
    $region55: #{lstm_ae_forward.1} parent=1 // pred_check_branch
      %1981 = sbr.rel (0) target = $region57
    $region56: #{lstm_ae_forward.1} parent=1 // pred_region
      _
    $region57: #{lstm_ae_forward.1} parent=1 // pred_fallthru
      _
    %1982 = vsyncpa [#allocation5], 1

</llo_original>
